<compile_context>
chip_gen: v5e
topology: v5e:2x2
jax: 0.10.0
libtpu: 0.0.40
codegen_flags: <defaults>
</compile_context>

<pallas_src>
import functools

import jax
import jax.numpy as jnp
from jax.experimental import pallas as pl
from jax.experimental.pallas import tpu as pltpu


# ----------------------------- config (small) -----------------------------
BATCH = 2
SEQ = 8
VOCAB = 256
HIDDEN = 128
N_HEADS = 4
HEAD_DIM = HIDDEN // N_HEADS        # 32
INTERMEDIATE = 256
N_LAYERS = 2
RMS_EPS = 1e-6
ROPE_BASE = 10000.0
NEG_INF = -1e9


# ------------------------------ Pallas kernel ------------------------------
def _rmsnorm(x, w, eps):
    """x: [M, H] f32, w: [1, H] f32 -> [M, H] f32 (Llama RMSNorm)."""
    var = jnp.mean(x * x, axis=-1, keepdims=True)
    return x * jax.lax.rsqrt(var + eps) * w


def _fused_forward_kernel(x_ref, mask_ref, cos_ref, sin_ref, lnf_ref, wlm_ref,
                          ln1_ref, wqkv_ref, wo_ref, ln2_ref, wgu_ref, wd_ref,
                          logits_ref, h_ref,
                          *, n_heads, head_dim, eps, scale, n_layers):
    layer = pl.program_id(0)

    # Residual stream lives in a VMEM scratch across the whole layer grid.
    @pl.when(layer == 0)
    def _():
        h_ref[...] = x_ref[...]

    h = h_ref[...]                                   # [M, H] f32
    M, H = h.shape
    D = head_dim
    half = D // 2

    mask = mask_ref[...]                             # [M, M] block-diag causal+pad
    cos = cos_ref[...]                               # [D, M]
    sin = sin_ref[...]                               # [D, M]

    # ------------------------- self-attention -------------------------
    xn = _rmsnorm(h, ln1_ref[0], eps)
    # Transposed fused QKV projection ("NT" matmul): [3H,H] x [M,H] -> [3H,M].
    # Keeping heads on the sublane axis makes the head split / rotate_half /
    # head merge pure (8-aligned) sublane ops -- no 32-lane slices, no lane
    # concatenation, no MXU rotate_half matrix.
    qkv_t = jax.lax.dot_general(
        wqkv_ref[0], xn.astype(jnp.bfloat16),
        (((1,), (1,)), ((), ())), preferred_element_type=jnp.float32)
    qkv = qkv_t.reshape(3, n_heads, D, M)            # sublane split only
    q = qkv[0]                                       # [NH, D, M]
    k = qkv[1]
    v = qkv[2]

    # HF rotate_half along the channel (sublane) axis, heads handled in batch.
    def rope(x):
        rot = jnp.concatenate([-x[:, half:, :], x[:, :half, :]], axis=1)
        return x * cos + rot * sin

    q = rope(q)
    k = rope(k)

    q_nt = jnp.swapaxes(q, 1, 2).astype(jnp.bfloat16)     # [NH, M, D]
    k_b = k.astype(jnp.bfloat16)                           # [NH, D, M]
    v_b = v.astype(jnp.bfloat16)                           # [NH, D, M]

    # Head-batched attention (flash-style NN / NT einsums, f32 accumulate).
    s = jnp.einsum('nmd,ndp->nmp', q_nt, k_b,
                   preferred_element_type=jnp.float32)     # [NH, M, M]
    s = s * scale + mask
    s = s - jnp.max(s, axis=-1, keepdims=True)
    p = jnp.exp(s)
    p = p * pl.reciprocal(jnp.sum(p, axis=-1, keepdims=True), approx=True)

    out_t = jnp.einsum('ndp,nmp->ndm', v_b, p.astype(jnp.bfloat16),
                       preferred_element_type=jnp.float32)  # [NH, D, M]
    attn = jnp.transpose(out_t.reshape(H, M))               # [M, H] lane-dense

    o = jnp.dot(attn.astype(jnp.bfloat16), wo_ref[0],
                preferred_element_type=jnp.float32)          # [M, H]
    h = h + o

    # --------------------------- SwiGLU MLP ---------------------------
    xn2 = _rmsnorm(h, ln2_ref[0], eps)
    gu = jnp.dot(xn2.astype(jnp.bfloat16), wgu_ref[0],
                 preferred_element_type=jnp.float32)         # [M, 2I]
    inter = gu.shape[-1] // 2
    g = gu[:, :inter]
    u = gu[:, inter:]
    act = (g * jax.nn.sigmoid(g)) * u                        # silu(g) * u, f32
    mlp = jnp.dot(act.astype(jnp.bfloat16), wd_ref[0],
                  preferred_element_type=jnp.float32)        # [M, H]
    h = h + mlp
    h_ref[...] = h

    # ------- fused final RMSNorm + lm_head, only on the last layer step -------
    @pl.when(layer == n_layers - 1)
    def _():
        xnf = _rmsnorm(h, lnf_ref[...], eps)
        logits_ref[...] = jnp.dot(
            xnf.astype(jnp.bfloat16), wlm_ref[...],
            preferred_element_type=jnp.float32).astype(logits_ref.dtype)


# ------------------------------- glue (JAX) --------------------------------
def llama_forward(params, input_ids, attention_mask):
    """input_ids: [B, S] int32, attention_mask: [B, S] int32 -> logits [B, S, V]."""
    B, S = input_ids.shape
    M = B * S
    H = HIDDEN

    # Embedding gather + batch folded into the matmul M dimension.
    h0 = params["embed"][input_ids].reshape(M, H)            # [M, H] f32

    # Block-diagonal (per-batch) causal + key-padding additive mask, [M, M].
    batch_ids = jnp.repeat(jnp.arange(B), S)                 # [M]
    pos_ids = jnp.tile(jnp.arange(S), B)                     # [M]
    key_ok = attention_mask.reshape(M).astype(bool)
    allowed = ((batch_ids[:, None] == batch_ids[None, :])
               & (pos_ids[:, None] >= pos_ids[None, :])
               & key_ok[None, :])
    add_mask = jnp.where(allowed, 0.0, NEG_INF).astype(jnp.float32)

    # RoPE tables in the transposed (channel, row) layout used by the kernel.
    half = HEAD_DIM // 2
    inv_freq = 1.0 / (ROPE_BASE ** (jnp.arange(half, dtype=jnp.float32) / half))
    ang = inv_freq[:, None] * pos_ids[None, :].astype(jnp.float32)   # [half, M]
    ang = jnp.concatenate([ang, ang], axis=0)                        # [D, M]
    cos_t = jnp.cos(ang)
    sin_t = jnp.sin(ang)

    scale = 1.0 / (HEAD_DIM ** 0.5)
    kernel = functools.partial(
        _fused_forward_kernel, n_heads=N_HEADS, head_dim=HEAD_DIM,
        eps=RMS_EPS, scale=scale, n_layers=N_LAYERS)

    logits = pl.pallas_call(
        kernel,
        grid=(N_LAYERS,),
        out_shape=jax.ShapeDtypeStruct((M, VOCAB), jnp.float32),
        in_specs=[
            pl.BlockSpec((M, H), lambda l: (0, 0)),                       # embedded tokens
            pl.BlockSpec((M, M), lambda l: (0, 0)),                       # additive mask
            pl.BlockSpec((HEAD_DIM, M), lambda l: (0, 0)),                # cos
            pl.BlockSpec((HEAD_DIM, M), lambda l: (0, 0)),                # sin
            pl.BlockSpec((1, H), lambda l: (0, 0)),                       # final ln
            pl.BlockSpec((H, VOCAB), lambda l: (0, 0)),                   # lm_head
            pl.BlockSpec((1, 1, H), lambda l: (l, 0, 0)),                 # ln1
            pl.BlockSpec((1, 3 * H, H), lambda l: (l, 0, 0)),             # wqkv [out,in]
            pl.BlockSpec((1, H, H), lambda l: (l, 0, 0)),                 # wo   [in,out]
            pl.BlockSpec((1, 1, H), lambda l: (l, 0, 0)),                 # ln2
            pl.BlockSpec((1, H, 2 * INTERMEDIATE), lambda l: (l, 0, 0)),  # w_gate|up
            pl.BlockSpec((1, INTERMEDIATE, H), lambda l: (l, 0, 0)),      # w_down
        ],
        out_specs=pl.BlockSpec((M, VOCAB), lambda l: (0, 0)),
        scratch_shapes=[pltpu.VMEM((M, H), jnp.float32)],                 # resident h
        compiler_params=pltpu.CompilerParams(
            dimension_semantics=("arbitrary",)),
    )(h0, add_mask, cos_t, sin_t, params["final_ln"], params["lm_head"],
      params["ln1"], params["wqkv"], params["wo"], params["ln2"],
      params["wgu"], params["wd"])
    return logits.reshape(B, S, VOCAB)


def init_params(key):
    def normal(k, shape, scale=0.02, dtype=jnp.float32):
        return (scale * jax.random.normal(k, shape, jnp.float32)).astype(dtype)

    keys = jax.random.split(key, 2 + N_LAYERS)
    wqkv, wo, wgu, wd = [], [], [], []
    for li in range(N_LAYERS):
        lk = jax.random.split(keys[2 + li], 4)
        # fused [wq | wk | wv], stored output-major ([3H, H]) for the NT matmul
        wqkv.append(normal(lk[0], (3 * HIDDEN, HIDDEN), dtype=jnp.bfloat16))
        wo.append(normal(lk[1], (HIDDEN, HIDDEN), dtype=jnp.bfloat16))
        # fused [w_gate | w_up]
        wgu.append(normal(lk[2], (HIDDEN, 2 * INTERMEDIATE), dtype=jnp.bfloat16))
        wd.append(normal(lk[3], (INTERMEDIATE, HIDDEN), dtype=jnp.bfloat16))
    return {
        "embed": normal(keys[0], (VOCAB, HIDDEN)),
        "final_ln": jnp.ones((1, HIDDEN), jnp.float32),
        "lm_head": normal(keys[1], (HIDDEN, VOCAB), dtype=jnp.bfloat16),
        "ln1": jnp.ones((N_LAYERS, 1, HIDDEN), jnp.float32),
        "ln2": jnp.ones((N_LAYERS, 1, HIDDEN), jnp.float32),
        "wqkv": jnp.stack(wqkv),
        "wo": jnp.stack(wo),
        "wgu": jnp.stack(wgu),
        "wd": jnp.stack(wd),
    }


# ---------------------------------- main -----------------------------------
if __name__ == "__main__":
    root = jax.random.PRNGKey(0)
    k_param, k_ids = jax.random.split(root)

    params = init_params(k_param)

    input_ids = jax.random.randint(k_ids, (BATCH, SEQ), 0, VOCAB, dtype=jnp.int32)
    # left-padded attention mask (HF convention: tokenizer.padding_side = 'left')
    attention_mask = jnp.array(
        [[1] * SEQ,
         [0, 0, 0] + [1] * (SEQ - 3)],
        dtype=jnp.int32,
    )

    logits = jax.jit(llama_forward)(params, input_ids, attention_mask)
    logits = jax.block_until_ready(logits)

    assert logits.shape == (BATCH, SEQ, VOCAB), logits.shape
    assert logits.dtype == jnp.float32
    assert bool(jnp.all(jnp.isfinite(logits)))
    print("KERNEL_OK")
</pallas_src>

<mosaic_0001>
module attributes {stable_mosaic.version = 11 : i64} {
  func.func @_fused_forward_kernel(%arg0: i32, %arg1: memref<16x128xf32, #tpu.memory_space<vmem>>, %arg2: memref<16x16xf32, #tpu.memory_space<vmem>>, %arg3: memref<32x16xf32, #tpu.memory_space<vmem>>, %arg4: memref<32x16xf32, #tpu.memory_space<vmem>>, %arg5: memref<1x128xf32, #tpu.memory_space<vmem>>, %arg6: memref<128x256xbf16, #tpu.memory_space<vmem>>, %arg7: memref<1x1x128xf32, #tpu.memory_space<vmem>>, %arg8: memref<1x384x128xbf16, #tpu.memory_space<vmem>>, %arg9: memref<1x128x128xbf16, #tpu.memory_space<vmem>>, %arg10: memref<1x1x128xf32, #tpu.memory_space<vmem>>, %arg11: memref<1x128x512xbf16, #tpu.memory_space<vmem>>, %arg12: memref<1x256x128xbf16, #tpu.memory_space<vmem>>, %arg13: memref<16x256xf32, #tpu.memory_space<vmem>>, %arg14: memref<16x128xf32, #tpu.memory_space<vmem>>) attributes {dimension_semantics = [#tpu.dimension_semantics<arbitrary>], iteration_bounds = array<i64: 2>, scalar_prefetch = 0 : i64, scratch_operands = 1 : i64, tpu.core_type = #tpu.core_type<tc>, window_params = [{pipeline_mode = #tpu.pipeline_mode<synchronous>, transform_indices = @transform_0, window_bounds = array<i64: 16, 128>}, {pipeline_mode = #tpu.pipeline_mode<synchronous>, transform_indices = @transform_1, window_bounds = array<i64: 16, 16>}, {pipeline_mode = #tpu.pipeline_mode<synchronous>, transform_indices = @transform_2, window_bounds = array<i64: 32, 16>}, {pipeline_mode = #tpu.pipeline_mode<synchronous>, transform_indices = @transform_3, window_bounds = array<i64: 32, 16>}, {pipeline_mode = #tpu.pipeline_mode<synchronous>, transform_indices = @transform_4, window_bounds = array<i64: 1, 128>}, {pipeline_mode = #tpu.pipeline_mode<synchronous>, transform_indices = @transform_5, window_bounds = array<i64: 128, 256>}, {transform_indices = @transform_6, window_bounds = array<i64: 1, 1, 128>}, {transform_indices = @transform_7, window_bounds = array<i64: 1, 384, 128>}, {transform_indices = @transform_8, window_bounds = array<i64: 1, 128, 128>}, {transform_indices = @transform_9, window_bounds = array<i64: 1, 1, 128>}, {transform_indices = @transform_10, window_bounds = array<i64: 1, 128, 512>}, {transform_indices = @transform_11, window_bounds = array<i64: 1, 256, 128>}, {pipeline_mode = #tpu.pipeline_mode<synchronous>, transform_indices = @transform_12, window_bounds = array<i64: 16, 256>}]} {
    %c0_i32 = arith.constant 0 : i32
    %0 = arith.cmpi eq, %arg0, %c0_i32 : i32
    %1 = arith.extui %0 : i1 to i32
    %c0_i32_0 = arith.constant 0 : i32
    %2 = arith.cmpi ne, %1, %c0_i32_0 : i32
    scf.if %2 {
      %c0_46 = arith.constant 0 : index
      %c0_47 = arith.constant 0 : index
      %121 = vector.load %arg1[%c0_46, %c0_47] : memref<16x128xf32, #tpu.memory_space<vmem>>, vector<16x128xf32>
      %c0_48 = arith.constant 0 : index
      %c0_49 = arith.constant 0 : index
      %122 = vector.load %arg14[%c0_48, %c0_49] : memref<16x128xf32, #tpu.memory_space<vmem>>, vector<16x128xf32>
      tpu.vector_store %arg14[%c0_48, %c0_49], %121 {strides = array<i32>} : memref<16x128xf32, #tpu.memory_space<vmem>>, vector<16x128xf32>,
    } else {
    }
    %c0 = arith.constant 0 : index
    %c0_1 = arith.constant 0 : index
    %3 = vector.load %arg14[%c0, %c0_1] : memref<16x128xf32, #tpu.memory_space<vmem>>, vector<16x128xf32>
    %c0_2 = arith.constant 0 : index
    %c0_3 = arith.constant 0 : index
    %4 = vector.load %arg2[%c0_2, %c0_3] : memref<16x16xf32, #tpu.memory_space<vmem>>, vector<16x16xf32>
    %c0_4 = arith.constant 0 : index
    %c0_5 = arith.constant 0 : index
    %5 = vector.load %arg3[%c0_4, %c0_5] : memref<32x16xf32, #tpu.memory_space<vmem>>, vector<32x16xf32>
    %c0_6 = arith.constant 0 : index
    %c0_7 = arith.constant 0 : index
    %6 = vector.load %arg4[%c0_6, %c0_7] : memref<32x16xf32, #tpu.memory_space<vmem>>, vector<32x16xf32>
    %c0_8 = arith.constant 0 : index
    %c0_9 = arith.constant 0 : index
    %c0_10 = arith.constant 0 : index
    %7 = vector.load %arg7[%c0_8, %c0_9, %c0_10] : memref<1x1x128xf32, #tpu.memory_space<vmem>>, vector<1x1x128xf32>
    %8 = vector.shape_cast %7 : vector<1x1x128xf32> to vector<1x128xf32>
    %9 = arith.mulf %3, %3 : vector<16x128xf32>
    %cst = arith.constant dense<0.000000e+00> : vector<16xf32>
    %10 = vector.multi_reduction <add>, %9, %cst [1] : vector<16x128xf32> to vector<16xf32>
    %11 = vector.shape_cast %10 : vector<16xf32> to vector<16x1xf32>
    %cst_11 = arith.constant 1.280000e+02 : f32
    %12 = vector.broadcast %cst_11 : f32 to vector<16x1xf32>
    %13 = arith.divf %11, %12 : vector<16x1xf32>
    %cst_12 = arith.constant 9.99999997E-7 : f32
    %14 = vector.broadcast %cst_12 : f32 to vector<16x1xf32>
    %15 = arith.addf %13, %14 : vector<16x1xf32>
    %16 = math.rsqrt %15 : vector<16x1xf32>
    %17 = vector.broadcast %16 : vector<16x1xf32> to vector<16x128xf32>
    %18 = arith.mulf %3, %17 : vector<16x128xf32>
    %19 = vector.broadcast %8 : vector<1x128xf32> to vector<16x128xf32>
    %20 = arith.mulf %18, %19 : vector<16x128xf32>
    %c0_13 = arith.constant 0 : index
    %c0_14 = arith.constant 0 : index
    %c0_15 = arith.constant 0 : index
    %21 = vector.load %arg8[%c0_13, %c0_14, %c0_15] : memref<1x384x128xbf16, #tpu.memory_space<vmem>>, vector<1x384x128xbf16>
    %22 = vector.shape_cast %21 : vector<1x384x128xbf16> to vector<384x128xbf16>
    %23 = arith.truncf %20 : vector<16x128xf32> to vector<16x128xbf16>
    %cst_16 = arith.constant dense<0.000000e+00> : vector<384x16xf32>
    %24 = tpu.matmul %22, %23, %cst_16 {dimension_numbers = #tpu.dot_dimension_numbers<[1], [1], [0], [0], [0, 0, 1, 0], [], []>} : vector<384x128xbf16>, vector<16x128xbf16>, vector<384x16xf32> -> vector<384x16xf32>
    %25 = vector.shape_cast %24 : vector<384x16xf32> to vector<3x4x32x16xf32>
    %26 = vector.extract_strided_slice %25 {offsets = [0, 0, 0, 0], sizes = [1, 4, 32, 16], strides = [1, 1, 1, 1]} : vector<3x4x32x16xf32> to vector<1x4x32x16xf32>
    %27 = vector.shape_cast %26 : vector<1x4x32x16xf32> to vector<4x32x16xf32>
    %28 = vector.extract_strided_slice %25 {offsets = [1, 0, 0, 0], sizes = [1, 4, 32, 16], strides = [1, 1, 1, 1]} : vector<3x4x32x16xf32> to vector<1x4x32x16xf32>
    %29 = vector.shape_cast %28 : vector<1x4x32x16xf32> to vector<4x32x16xf32>
    %30 = vector.extract_strided_slice %25 {offsets = [2, 0, 0, 0], sizes = [1, 4, 32, 16], strides = [1, 1, 1, 1]} : vector<3x4x32x16xf32> to vector<1x4x32x16xf32>
    %31 = vector.shape_cast %30 : vector<1x4x32x16xf32> to vector<4x32x16xf32>
    %32 = vector.extract_strided_slice %27 {offsets = [0, 16, 0], sizes = [4, 16, 16], strides = [1, 1, 1]} : vector<4x32x16xf32> to vector<4x16x16xf32>
    %cst_17 = arith.constant 0.000000e+00 : f32
    %33 = vector.broadcast %cst_17 : f32 to vector<4x16x16xf32>
    %34 = arith.subf %33, %32 : vector<4x16x16xf32>
    %35 = vector.extract_strided_slice %27 {offsets = [0, 0, 0], sizes = [4, 16, 16], strides = [1, 1, 1]} : vector<4x32x16xf32> to vector<4x16x16xf32>
    %36 = tpu.concatenate %34, %35 in 1 : vector<4x16x16xf32>, vector<4x16x16xf32> -> vector<4x32x16xf32>
    %37 = vector.shape_cast %5 : vector<32x16xf32> to vector<1x32x16xf32>
    %38 = vector.broadcast %37 : vector<1x32x16xf32> to vector<4x32x16xf32>
    %39 = arith.mulf %27, %38 : vector<4x32x16xf32>
    %40 = vector.shape_cast %6 : vector<32x16xf32> to vector<1x32x16xf32>
    %41 = vector.broadcast %40 : vector<1x32x16xf32> to vector<4x32x16xf32>
    %42 = arith.mulf %36, %41 : vector<4x32x16xf32>
    %43 = arith.addf %39, %42 : vector<4x32x16xf32>
    %44 = vector.extract_strided_slice %29 {offsets = [0, 16, 0], sizes = [4, 16, 16], strides = [1, 1, 1]} : vector<4x32x16xf32> to vector<4x16x16xf32>
    %cst_18 = arith.constant 0.000000e+00 : f32
    %45 = vector.broadcast %cst_18 : f32 to vector<4x16x16xf32>
    %46 = arith.subf %45, %44 : vector<4x16x16xf32>
    %47 = vector.extract_strided_slice %29 {offsets = [0, 0, 0], sizes = [4, 16, 16], strides = [1, 1, 1]} : vector<4x32x16xf32> to vector<4x16x16xf32>
    %48 = tpu.concatenate %46, %47 in 1 : vector<4x16x16xf32>, vector<4x16x16xf32> -> vector<4x32x16xf32>
    %49 = vector.shape_cast %5 : vector<32x16xf32> to vector<1x32x16xf32>
    %50 = vector.broadcast %49 : vector<1x32x16xf32> to vector<4x32x16xf32>
    %51 = arith.mulf %29, %50 : vector<4x32x16xf32>
    %52 = vector.shape_cast %6 : vector<32x16xf32> to vector<1x32x16xf32>
    %53 = vector.broadcast %52 : vector<1x32x16xf32> to vector<4x32x16xf32>
    %54 = arith.mulf %48, %53 : vector<4x32x16xf32>
    %55 = arith.addf %51, %54 : vector<4x32x16xf32>
    %56 = tpu.transpose %43, [0, 2, 1] : vector<4x32x16xf32> -> vector<4x16x32xf32>
    %57 = arith.truncf %56 : vector<4x16x32xf32> to vector<4x16x32xbf16>
    %58 = arith.truncf %55 : vector<4x32x16xf32> to vector<4x32x16xbf16>
    %59 = arith.truncf %31 : vector<4x32x16xf32> to vector<4x32x16xbf16>
    "tpu.trace_start"() <{level = 10 : i32, message = "nmd,ndp->nmp"}> : () -> ()
    %cst_19 = arith.constant dense<0.000000e+00> : vector<4x16x16xf32>
    %60 = tpu.matmul %57, %58, %cst_19 {dimension_numbers = #tpu.dot_dimension_numbers<[2], [1], [1], [2], [0, 0, 0, 1, 1, 2], [0], [0]>} : vector<4x16x32xbf16>, vector<4x32x16xbf16>, vector<4x16x16xf32> -> vector<4x16x16xf32>
    "tpu.trace_stop"() : () -> ()
    %cst_20 = arith.constant 0.176776692 : f32
    %61 = vector.broadcast %cst_20 : f32 to vector<4x16x16xf32>
    %62 = arith.mulf %60, %61 : vector<4x16x16xf32>
    %63 = vector.shape_cast %4 : vector<16x16xf32> to vector<1x16x16xf32>
    %64 = vector.broadcast %63 : vector<1x16x16xf32> to vector<4x16x16xf32>
    %65 = arith.addf %62, %64 : vector<4x16x16xf32>
    %cst_21 = arith.constant dense<0xFF800000> : vector<4x16xf32>
    %66 = vector.multi_reduction <maximumf>, %65, %cst_21 [2] : vector<4x16x16xf32> to vector<4x16xf32>
    %67 = vector.shape_cast %66 : vector<4x16xf32> to vector<4x16x1xf32>
    %68 = vector.broadcast %67 : vector<4x16x1xf32> to vector<4x16x16xf32>
    %69 = arith.subf %65, %68 : vector<4x16x16xf32>
    %70 = math.exp %69 : vector<4x16x16xf32>
    %cst_22 = arith.constant dense<0.000000e+00> : vector<4x16xf32>
    %71 = vector.multi_reduction <add>, %70, %cst_22 [2] : vector<4x16x16xf32> to vector<4x16xf32>
    %72 = vector.shape_cast %71 : vector<4x16xf32> to vector<4x16x1xf32>
    %73 = tpu.reciprocal %72 {approx = true} : vector<4x16x1xf32> -> vector<4x16x1xf32>
    %74 = vector.broadcast %73 : vector<4x16x1xf32> to vector<4x16x16xf32>
    %75 = arith.mulf %70, %74 : vector<4x16x16xf32>
    %76 = arith.truncf %75 : vector<4x16x16xf32> to vector<4x16x16xbf16>
    "tpu.trace_start"() <{level = 10 : i32, message = "ndp,nmp->ndm"}> : () -> ()
    %cst_23 = arith.constant dense<0.000000e+00> : vector<4x32x16xf32>
    %77 = tpu.matmul %59, %76, %cst_23 {dimension_numbers = #tpu.dot_dimension_numbers<[2], [2], [1], [1], [0, 0, 0, 1, 1, 1], [0], [0]>} : vector<4x32x16xbf16>, vector<4x16x16xbf16>, vector<4x32x16xf32> -> vector<4x32x16xf32>
    "tpu.trace_stop"() : () -> ()
    %78 = vector.shape_cast %77 : vector<4x32x16xf32> to vector<128x16xf32>
    %79 = tpu.transpose %78, [1, 0] : vector<128x16xf32> -> vector<16x128xf32>
    %80 = arith.truncf %79 : vector<16x128xf32> to vector<16x128xbf16>
    %c0_24 = arith.constant 0 : index
    %c0_25 = arith.constant 0 : index
    %c0_26 = arith.constant 0 : index
    %81 = vector.load %arg9[%c0_24, %c0_25, %c0_26] : memref<1x128x128xbf16, #tpu.memory_space<vmem>>, vector<1x128x128xbf16>
    %82 = vector.shape_cast %81 : vector<1x128x128xbf16> to vector<128x128xbf16>
    %cst_27 = arith.constant dense<0.000000e+00> : vector<16x128xf32>
    %83 = tpu.matmul %80, %82, %cst_27 {dimension_numbers = #tpu.dot_dimension_numbers<[1], [0], [0], [1], [0, 0, 1, 1], [], []>} : vector<16x128xbf16>, vector<128x128xbf16>, vector<16x128xf32> -> vector<16x128xf32>
    %84 = arith.addf %3, %83 : vector<16x128xf32>
    %c0_28 = arith.constant 0 : index
    %c0_29 = arith.constant 0 : index
    %c0_30 = arith.constant 0 : index
    %85 = vector.load %arg10[%c0_28, %c0_29, %c0_30] : memref<1x1x128xf32, #tpu.memory_space<vmem>>, vector<1x1x128xf32>
    %86 = vector.shape_cast %85 : vector<1x1x128xf32> to vector<1x128xf32>
    %87 = arith.mulf %84, %84 : vector<16x128xf32>
    %cst_31 = arith.constant dense<0.000000e+00> : vector<16xf32>
    %88 = vector.multi_reduction <add>, %87, %cst_31 [1] : vector<16x128xf32> to vector<16xf32>
    %89 = vector.shape_cast %88 : vector<16xf32> to vector<16x1xf32>
    %cst_32 = arith.constant 1.280000e+02 : f32
    %90 = vector.broadcast %cst_32 : f32 to vector<16x1xf32>
    %91 = arith.divf %89, %90 : vector<16x1xf32>
    %cst_33 = arith.constant 9.99999997E-7 : f32
    %92 = vector.broadcast %cst_33 : f32 to vector<16x1xf32>
    %93 = arith.addf %91, %92 : vector<16x1xf32>
    %94 = math.rsqrt %93 : vector<16x1xf32>
    %95 = vector.broadcast %94 : vector<16x1xf32> to vector<16x128xf32>
    %96 = arith.mulf %84, %95 : vector<16x128xf32>
    %97 = vector.broadcast %86 : vector<1x128xf32> to vector<16x128xf32>
    %98 = arith.mulf %96, %97 : vector<16x128xf32>
    %99 = arith.truncf %98 : vector<16x128xf32> to vector<16x128xbf16>
    %c0_34 = arith.constant 0 : index
    %c0_35 = arith.constant 0 : index
    %c0_36 = arith.constant 0 : index
    %100 = vector.load %arg11[%c0_34, %c0_35, %c0_36] : memref<1x128x512xbf16, #tpu.memory_space<vmem>>, vector<1x128x512xbf16>
    %101 = vector.shape_cast %100 : vector<1x128x512xbf16> to vector<128x512xbf16>
    %cst_37 = arith.constant dense<0.000000e+00> : vector<16x512xf32>
    %102 = tpu.matmul %99, %101, %cst_37 {dimension_numbers = #tpu.dot_dimension_numbers<[1], [0], [0], [1], [0, 0, 1, 1], [], []>} : vector<16x128xbf16>, vector<128x512xbf16>, vector<16x512xf32> -> vector<16x512xf32>
    %103 = vector.extract_strided_slice %102 {offsets = [0, 0], sizes = [16, 256], strides = [1, 1]} : vector<16x512xf32> to vector<16x256xf32>
    %104 = vector.extract_strided_slice %102 {offsets = [0, 256], sizes = [16, 256], strides = [1, 1]} : vector<16x512xf32> to vector<16x256xf32>
    %105 = arith.negf %103 : vector<16x256xf32>
    %106 = math.exp %105 : vector<16x256xf32>
    %cst_38 = arith.constant 1.000000e+00 : f32
    %107 = vector.broadcast %cst_38 : f32 to vector<16x256xf32>
    %108 = arith.addf %107, %106 : vector<16x256xf32>
    %109 = arith.divf %107, %108 : vector<16x256xf32>
    %110 = arith.mulf %103, %109 : vector<16x256xf32>
    %111 = arith.mulf %110, %104 : vector<16x256xf32>
    %112 = arith.truncf %111 : vector<16x256xf32> to vector<16x256xbf16>
    %c0_39 = arith.constant 0 : index
    %c0_40 = arith.constant 0 : index
    %c0_41 = arith.constant 0 : index
    %113 = vector.load %arg12[%c0_39, %c0_40, %c0_41] : memref<1x256x128xbf16, #tpu.memory_space<vmem>>, vector<1x256x128xbf16>
    %114 = vector.shape_cast %113 : vector<1x256x128xbf16> to vector<256x128xbf16>
    %cst_42 = arith.constant dense<0.000000e+00> : vector<16x128xf32>
    %115 = tpu.matmul %112, %114, %cst_42 {dimension_numbers = #tpu.dot_dimension_numbers<[1], [0], [0], [1], [0, 0, 1, 1], [], []>} : vector<16x256xbf16>, vector<256x128xbf16>, vector<16x128xf32> -> vector<16x128xf32>
    %116 = arith.addf %84, %115 : vector<16x128xf32>
    %c0_43 = arith.constant 0 : index
    %c0_44 = arith.constant 0 : index
    %117 = vector.load %arg14[%c0_43, %c0_44] : memref<16x128xf32, #tpu.memory_space<vmem>>, vector<16x128xf32>
    tpu.vector_store %arg14[%c0_43, %c0_44], %116 {strides = array<i32>} : memref<16x128xf32, #tpu.memory_space<vmem>>, vector<16x128xf32>,
    %c1_i32 = arith.constant 1 : i32
    %118 = arith.cmpi eq, %arg0, %c1_i32 : i32
    %119 = arith.extui %118 : i1 to i32
    %c0_i32_45 = arith.constant 0 : i32
    %120 = arith.cmpi ne, %119, %c0_i32_45 : i32
    scf.if %120 {
      %c0_46 = arith.constant 0 : index
      %c0_47 = arith.constant 0 : index
      %121 = vector.load %arg5[%c0_46, %c0_47] : memref<1x128xf32, #tpu.memory_space<vmem>>, vector<1x128xf32>
      %122 = arith.mulf %116, %116 : vector<16x128xf32>
      %cst_48 = arith.constant dense<0.000000e+00> : vector<16xf32>
      %123 = vector.multi_reduction <add>, %122, %cst_48 [1] : vector<16x128xf32> to vector<16xf32>
      %124 = vector.shape_cast %123 : vector<16xf32> to vector<16x1xf32>
      %cst_49 = arith.constant 1.280000e+02 : f32
      %125 = vector.broadcast %cst_49 : f32 to vector<16x1xf32>
      %126 = arith.divf %124, %125 : vector<16x1xf32>
      %cst_50 = arith.constant 9.99999997E-7 : f32
      %127 = vector.broadcast %cst_50 : f32 to vector<16x1xf32>
      %128 = arith.addf %126, %127 : vector<16x1xf32>
      %129 = math.rsqrt %128 : vector<16x1xf32>
      %130 = vector.broadcast %129 : vector<16x1xf32> to vector<16x128xf32>
      %131 = arith.mulf %116, %130 : vector<16x128xf32>
      %132 = vector.broadcast %121 : vector<1x128xf32> to vector<16x128xf32>
      %133 = arith.mulf %131, %132 : vector<16x128xf32>
      %134 = arith.truncf %133 : vector<16x128xf32> to vector<16x128xbf16>
      %c0_51 = arith.constant 0 : index
      %c0_52 = arith.constant 0 : index
      %135 = vector.load %arg6[%c0_51, %c0_52] : memref<128x256xbf16, #tpu.memory_space<vmem>>, vector<128x256xbf16>
      %cst_53 = arith.constant dense<0.000000e+00> : vector<16x256xf32>
      %136 = tpu.matmul %134, %135, %cst_53 {dimension_numbers = #tpu.dot_dimension_numbers<[1], [0], [0], [1], [0, 0, 1, 1], [], []>} : vector<16x128xbf16>, vector<128x256xbf16>, vector<16x256xf32> -> vector<16x256xf32>
      %c0_54 = arith.constant 0 : index
      %c0_55 = arith.constant 0 : index
      %137 = vector.load %arg13[%c0_54, %c0_55] : memref<16x256xf32, #tpu.memory_space<vmem>>, vector<16x256xf32>
      tpu.vector_store %arg13[%c0_54, %c0_55], %136 {strides = array<i32>} : memref<16x256xf32, #tpu.memory_space<vmem>>, vector<16x256xf32>,
    } else {
    }
    return
  }
  func.func @transform_0(%arg0: i32) -> (i32, i32) {
    %c0_i32 = arith.constant 0 : i32
    %c0_i32_0 = arith.constant 0 : i32
    %c0_i32_1 = arith.constant 0 : i32
    return %c0_i32, %c0_i32_0 : i32, i32
  }
  func.func @transform_1(%arg0: i32) -> (i32, i32) {
    %c0_i32 = arith.constant 0 : i32
    %c0_i32_0 = arith.constant 0 : i32
    %c0_i32_1 = arith.constant 0 : i32
    return %c0_i32, %c0_i32_0 : i32, i32
  }
  func.func @transform_2(%arg0: i32) -> (i32, i32) {
    %c0_i32 = arith.constant 0 : i32
    %c0_i32_0 = arith.constant 0 : i32
    %c0_i32_1 = arith.constant 0 : i32
    return %c0_i32, %c0_i32_0 : i32, i32
  }
  func.func @transform_3(%arg0: i32) -> (i32, i32) {
    %c0_i32 = arith.constant 0 : i32
    %c0_i32_0 = arith.constant 0 : i32
    %c0_i32_1 = arith.constant 0 : i32
    return %c0_i32, %c0_i32_0 : i32, i32
  }
  func.func @transform_4(%arg0: i32) -> (i32, i32) {
    %c0_i32 = arith.constant 0 : i32
    %c0_i32_0 = arith.constant 0 : i32
    %c0_i32_1 = arith.constant 0 : i32
    return %c0_i32, %c0_i32_0 : i32, i32
  }
  func.func @transform_5(%arg0: i32) -> (i32, i32) {
    %c0_i32 = arith.constant 0 : i32
    %c0_i32_0 = arith.constant 0 : i32
    %c0_i32_1 = arith.constant 0 : i32
    return %c0_i32, %c0_i32_0 : i32, i32
  }
  func.func @transform_6(%arg0: i32) -> (i32, i32, i32) {
    %c0_i32 = arith.constant 0 : i32
    %c0_i32_0 = arith.constant 0 : i32
    %c0_i32_1 = arith.constant 0 : i32
    return %arg0, %c0_i32, %c0_i32_0 : i32, i32, i32
  }
  func.func @transform_7(%arg0: i32) -> (i32, i32, i32) {
    %c0_i32 = arith.constant 0 : i32
    %c0_i32_0 = arith.constant 0 : i32
    %c0_i32_1 = arith.constant 0 : i32
    return %arg0, %c0_i32, %c0_i32_0 : i32, i32, i32
  }
  func.func @transform_8(%arg0: i32) -> (i32, i32, i32) {
    %c0_i32 = arith.constant 0 : i32
    %c0_i32_0 = arith.constant 0 : i32
    %c0_i32_1 = arith.constant 0 : i32
    return %arg0, %c0_i32, %c0_i32_0 : i32, i32, i32
  }
  func.func @transform_9(%arg0: i32) -> (i32, i32, i32) {
    %c0_i32 = arith.constant 0 : i32
    %c0_i32_0 = arith.constant 0 : i32
    %c0_i32_1 = arith.constant 0 : i32
    return %arg0, %c0_i32, %c0_i32_0 : i32, i32, i32
  }
  func.func @transform_10(%arg0: i32) -> (i32, i32, i32) {
    %c0_i32 = arith.constant 0 : i32
    %c0_i32_0 = arith.constant 0 : i32
    %c0_i32_1 = arith.constant 0 : i32
    return %arg0, %c0_i32, %c0_i32_0 : i32, i32, i32
  }
  func.func @transform_11(%arg0: i32) -> (i32, i32, i32) {
    %c0_i32 = arith.constant 0 : i32
    %c0_i32_0 = arith.constant 0 : i32
    %c0_i32_1 = arith.constant 0 : i32
    return %arg0, %c0_i32, %c0_i32_0 : i32, i32, i32
  }
  func.func @transform_12(%arg0: i32) -> (i32, i32) {
    %c0_i32 = arith.constant 0 : i32
    %c0_i32_0 = arith.constant 0 : i32
    %c0_i32_1 = arith.constant 0 : i32
    return %c0_i32, %c0_i32_0 : i32, i32
  }
}

</mosaic_0001>

<llo_original>
// kernel: llama_forward.1
$region0: #{llama_forward.1}
  #allocation0 [shape = 'u32[]', space=smem, size = 0x4, offset = 0x4, fixed_abs, tag = 'smem constant byte address 0x4 - core index']
  #allocation1 [shape = 'u32[72,128]{1,0:T(1,128)}', space=vmem, size = 0x9000, scoped, tag = 'internal scratch']
  #allocation2 [shape = 'f32[16,128]{1,0:T(8,128)}', space=vmem, size = 0x2000, scoped, tag = 'scratch operand']
  %s0 = inlined_call_operand.vmem [shape: f32[16,128], index: 0, kind: input, shape index: {}]
  %s1 = inlined_call_operand.vmem [shape: f32[16,16], index: 1, kind: input, shape index: {}]
  %s2 = inlined_call_operand.vmem [shape: f32[32,16], index: 2, kind: input, shape index: {}]
  %s3 = inlined_call_operand.vmem [shape: f32[32,16], index: 3, kind: input, shape index: {}]
  %s4 = inlined_call_operand.vmem [shape: f32[1,128], index: 4, kind: input, shape index: {}]
  %s5 = inlined_call_operand.hbm [shape: bf16[128,256], index: 5, kind: input, shape index: {}]
  %s6 = inlined_call_operand.vmem [shape: f32[2,1,128], index: 6, kind: input, shape index: {}]
  %s7 = inlined_call_operand.hbm [shape: bf16[2,384,128], index: 7, kind: input, shape index: {}]
  %s8 = inlined_call_operand.hbm [shape: bf16[2,128,128], index: 8, kind: input, shape index: {}]
  %s9 = inlined_call_operand.vmem [shape: f32[2,1,128], index: 9, kind: input, shape index: {}]
  %s10 = inlined_call_operand.hbm [shape: bf16[2,128,512], index: 10, kind: input, shape index: {}]
  %s11 = inlined_call_operand.vmem [shape: bf16[2,256,128], index: 11, kind: input, shape index: {}]
  %s12 = inlined_call_operand.hbm [shape: f32[16,256], index: 12, kind: output, shape index: {}]
  %s13 = sld [smem:[#allocation0]]
  $region105: #{llama_forward.1} parent=0
    _
  %s15 = ssub.s32 1, %s13
  %s16 = scalar_select 0, %s15, %s13
  $region1: #{llama_forward.1} parent=0
    #allocation3 [shape = 'u8[65536]{0}', space=vmem, size = 0x10000, scoped, tag = 'input window, operand 5, single buffered']
    #allocation4 [shape = 's32[2]{0}', space=sflag, size = 0x8, scoped, tag = 'scoped memory for llama_forward.1']
    #allocation5 [shape = 's32[2]{0}', space=sflag, size = 0x8, scoped, tag = 'scoped memory for llama_forward.1']
    #allocation6 [shape = 'u8[196608]{0}', space=vmem, size = 0x30000, scoped, tag = 'input window, operand 7']
    #allocation7 [shape = 's32[2]{0}', space=sflag, size = 0x8, scoped, tag = 'scoped memory for llama_forward.1']
    #allocation8 [shape = 'u8[65536]{0}', space=vmem, size = 0x10000, scoped, tag = 'input window, operand 8']
    #allocation9 [shape = 'u8[262144]{0}', space=vmem, size = 0x40000, scoped, tag = 'input window, operand 10']
    #allocation10 [shape = 's32[2]{0}', space=sflag, size = 0x8, scoped, tag = 'scoped memory for llama_forward.1']
    #allocation11 [shape = 'u8[16384]{0}', space=vmem, size = 0x4000, scoped, tag = 'output window, operand 0, single buffered']
    %17 = vsyncpa [#allocation4], 0
    %18 = vsyncpa [#allocation7], 0
    %s19 = scalar_lea.sflag [#allocation7], 1
    %20 = vsyncpa %s19, 0
    %21 = vsyncpa [#allocation10], 0
    %s22 = scalar_lea.sflag [#allocation10], 1
    %23 = vsyncpa %s22, 0
    %24 = vsyncpa [#allocation5], 0
    loop: start=0, step=1, limit=4
    $region2: #{llama_forward.1} parent=1 // loop_pre_header
      _
    $region3: #{llama_forward.1} parent=1 // loop_header
      %s26 = sphi 0, %s30
      %p27 = scmp.ge.s32.totalorder %s26, 4
      %s34 = sphi 0, %s34
      %s36 = sphi 0, %s34
      %s37 = sphi 0, %s36
      %s51 = sphi 0, %s37
      %s55 = sphi 0, %s55
      %s57 = sphi 0, %s55
      %s58 = sphi 0, %s57
      %s72 = sphi 0, %s58
      %s76 = sphi 0, %s76
      %s78 = sphi 0, %s76
      %s79 = sphi 0, %s78
      %s93 = sphi 0, %s79
      %s97 = sphi 0, %s97
      %s99 = sphi 0, %s97
      %s100 = sphi 0, %s99
      %s114 = sphi 0, %s100
      %s118 = sphi 0, %s118
      %s120 = sphi 0, %s118
      %s121 = sphi 0, %s120
      %s135 = sphi 0, %s121
      %s139 = sphi 0, %s139
      %s141 = sphi 0, %s139
      %s142 = sphi 0, %s141
      %s156 = sphi 0, %s142
      %s162 = sphi 0, %s164
      %s165 = sphi 0, %s162
      %s166 = sphi 0, %s165
      %s182 = sphi 0, %s166
      %s188 = sphi 0, %s190
      %s191 = sphi 0, %s188
      %s192 = sphi 0, %s191
      %s208 = sphi 0, %s192
      %s214 = sphi 0, %s216
      %s217 = sphi 0, %s214
      %s218 = sphi 0, %s217
      %s234 = sphi 0, %s218
      %s240 = sphi 0, %s242
      %s243 = sphi 0, %s240
      %s244 = sphi 0, %s243
      %s260 = sphi 0, %s244
      %s266 = sphi 0, %s268
      %s269 = sphi 0, %s266
      %s270 = sphi 0, %s269
      %s286 = sphi 0, %s270
      %s292 = sphi 0, %s294
      %s295 = sphi 0, %s292
      %s296 = sphi 0, %s295
      %s312 = sphi 0, %s296
      %s316 = sphi 0, %s316
      %s318 = sphi 0, %s316
      %s319 = sphi 0, %s318
      %s333 = sphi 0, %s319
    $region4: #{llama_forward.1} parent=1 // loop_header_branch
      %29 = sbr.rel (%p27) target = $region8
    $region5: #{llama_forward.1} parent=1 // loop_body
      %s31 = ssub.s32 %s26, 1
      %s32 = ssub.s32 %s26, 2
      %s33 = sadd.s32 %s26, 1
      %s35 = sadd.s32 %s34, 1
      %p38 = scmp.eq.s32.totalorder %s26, 1
      %p39 = scmp.ne.s32.totalorder %s34, %s36
      %p40 = scmp.eq.s32.totalorder %s26, 0
      %p41 = por %p39, %p40
      %p42 = scmp.ne.s32.totalorder %s34, %s36
      %p43 = scmp.eq.s32.totalorder %s31, 1
      %p44 = por %p42, %p43
      %p45 = scmp.ne.s32.totalorder %s36, %s37
      %p46 = scmp.eq.s32.totalorder %s31, 0
      %p47 = por %p45, %p46
      %p48 = scmp.ne.s32.totalorder %s36, %s37
      %p49 = scmp.eq.s32.totalorder %s32, 1
      %p50 = por %p48, %p49
      %p52 = scmp.ne.s32.totalorder %s37, %s51
      %p53 = scmp.eq.s32.totalorder %s32, 0
      %p54 = por %p52, %p53
      %s56 = sadd.s32 %s55, 1
      %p59 = scmp.eq.s32.totalorder %s26, 1
      %p60 = scmp.ne.s32.totalorder %s55, %s57
      %p61 = scmp.eq.s32.totalorder %s26, 0
      %p62 = por %p60, %p61
      %p63 = scmp.ne.s32.totalorder %s55, %s57
      %p64 = scmp.eq.s32.totalorder %s31, 1
      %p65 = por %p63, %p64
      %p66 = scmp.ne.s32.totalorder %s57, %s58
      %p67 = scmp.eq.s32.totalorder %s31, 0
      %p68 = por %p66, %p67
      %p69 = scmp.ne.s32.totalorder %s57, %s58
      %p70 = scmp.eq.s32.totalorder %s32, 1
      %p71 = por %p69, %p70
      %p73 = scmp.ne.s32.totalorder %s58, %s72
      %p74 = scmp.eq.s32.totalorder %s32, 0
      %p75 = por %p73, %p74
      %s77 = sadd.s32 %s76, 1
      %p80 = scmp.eq.s32.totalorder %s26, 1
      %p81 = scmp.ne.s32.totalorder %s76, %s78
      %p82 = scmp.eq.s32.totalorder %s26, 0
      %p83 = por %p81, %p82
      %p84 = scmp.ne.s32.totalorder %s76, %s78
      %p85 = scmp.eq.s32.totalorder %s31, 1
      %p86 = por %p84, %p85
      %p87 = scmp.ne.s32.totalorder %s78, %s79
      %p88 = scmp.eq.s32.totalorder %s31, 0
      %p89 = por %p87, %p88
      %p90 = scmp.ne.s32.totalorder %s78, %s79
      %p91 = scmp.eq.s32.totalorder %s32, 1
      %p92 = por %p90, %p91
      %p94 = scmp.ne.s32.totalorder %s79, %s93
      %p95 = scmp.eq.s32.totalorder %s32, 0
      %p96 = por %p94, %p95
      %s98 = sadd.s32 %s97, 1
      %p101 = scmp.eq.s32.totalorder %s26, 1
      %p102 = scmp.ne.s32.totalorder %s97, %s99
      %p103 = scmp.eq.s32.totalorder %s26, 0
      %p104 = por %p102, %p103
      %p105 = scmp.ne.s32.totalorder %s97, %s99
      %p106 = scmp.eq.s32.totalorder %s31, 1
      %p107 = por %p105, %p106
      %p108 = scmp.ne.s32.totalorder %s99, %s100
      %p109 = scmp.eq.s32.totalorder %s31, 0
      %p110 = por %p108, %p109
      %p111 = scmp.ne.s32.totalorder %s99, %s100
      %p112 = scmp.eq.s32.totalorder %s32, 1
      %p113 = por %p111, %p112
      %p115 = scmp.ne.s32.totalorder %s100, %s114
      %p116 = scmp.eq.s32.totalorder %s32, 0
      %p117 = por %p115, %p116
      %s119 = sadd.s32 %s118, 1
      %p122 = scmp.eq.s32.totalorder %s26, 1
      %p123 = scmp.ne.s32.totalorder %s118, %s120
      %p124 = scmp.eq.s32.totalorder %s26, 0
      %p125 = por %p123, %p124
      %p126 = scmp.ne.s32.totalorder %s118, %s120
      %p127 = scmp.eq.s32.totalorder %s31, 1
      %p128 = por %p126, %p127
      %p129 = scmp.ne.s32.totalorder %s120, %s121
      %p130 = scmp.eq.s32.totalorder %s31, 0
      %p131 = por %p129, %p130
      %p132 = scmp.ne.s32.totalorder %s120, %s121
      %p133 = scmp.eq.s32.totalorder %s32, 1
      %p134 = por %p132, %p133
      %p136 = scmp.ne.s32.totalorder %s121, %s135
      %p137 = scmp.eq.s32.totalorder %s32, 0
      %p138 = por %p136, %p137
      %s140 = sadd.s32 %s139, 1
      %p143 = scmp.eq.s32.totalorder %s26, 1
      %p144 = scmp.ne.s32.totalorder %s139, %s141
      %p145 = scmp.eq.s32.totalorder %s26, 0
      %p146 = por %p144, %p145
      %p147 = scmp.ne.s32.totalorder %s139, %s141
      %p148 = scmp.eq.s32.totalorder %s31, 1
      %p149 = por %p147, %p148
      %p150 = scmp.ne.s32.totalorder %s141, %s142
      %p151 = scmp.eq.s32.totalorder %s31, 0
      %p152 = por %p150, %p151
      %p153 = scmp.ne.s32.totalorder %s141, %s142
      %p154 = scmp.eq.s32.totalorder %s32, 1
      %p155 = por %p153, %p154
      %p157 = scmp.ne.s32.totalorder %s142, %s156
      %p158 = scmp.eq.s32.totalorder %s32, 0
      %p159 = por %p157, %p158
      %s160 = ssub.s32 %s26, %s33
      %p161 = scmp.eq.s32.totalorder %s160, 0
      %s163 = sadd.s32 %s162, 1
      %s164 = scalar_select %p161, %s162, %s163
      %p167 = pneg %p161
      %p168 = scmp.eq.s32.totalorder %s26, 1
      %p169 = por %p167, %p168
      %p170 = scmp.ne.s32.totalorder %s162, %s165
      %p171 = scmp.eq.s32.totalorder %s26, 0
      %p172 = por %p170, %p171
      %p173 = scmp.ne.s32.totalorder %s162, %s165
      %p174 = scmp.eq.s32.totalorder %s31, 1
      %p175 = por %p173, %p174
      %p176 = scmp.ne.s32.totalorder %s165, %s166
      %p177 = scmp.eq.s32.totalorder %s31, 0
      %p178 = por %p176, %p177
      %p179 = scmp.ne.s32.totalorder %s165, %s166
      %p180 = scmp.eq.s32.totalorder %s32, 1
      %p181 = por %p179, %p180
      %p183 = scmp.ne.s32.totalorder %s166, %s182
      %p184 = scmp.eq.s32.totalorder %s32, 0
      %p185 = por %p183, %p184
      %s186 = ssub.s32 %s26, %s33
      %p187 = scmp.eq.s32.totalorder %s186, 0
      %s189 = sadd.s32 %s188, 1
      %s190 = scalar_select %p187, %s188, %s189
      %p193 = pneg %p187
      %p194 = scmp.eq.s32.totalorder %s26, 1
      %p195 = por %p193, %p194
      %p196 = scmp.ne.s32.totalorder %s188, %s191
      %p197 = scmp.eq.s32.totalorder %s26, 0
      %p198 = por %p196, %p197
      %p199 = scmp.ne.s32.totalorder %s188, %s191
      %p200 = scmp.eq.s32.totalorder %s31, 1
      %p201 = por %p199, %p200
      %p202 = scmp.ne.s32.totalorder %s191, %s192
      %p203 = scmp.eq.s32.totalorder %s31, 0
      %p204 = por %p202, %p203
      %p205 = scmp.ne.s32.totalorder %s191, %s192
      %p206 = scmp.eq.s32.totalorder %s32, 1
      %p207 = por %p205, %p206
      %p209 = scmp.ne.s32.totalorder %s192, %s208
      %p210 = scmp.eq.s32.totalorder %s32, 0
      %p211 = por %p209, %p210
      %s212 = ssub.s32 %s26, %s33
      %p213 = scmp.eq.s32.totalorder %s212, 0
      %s215 = sadd.s32 %s214, 1
      %s216 = scalar_select %p213, %s214, %s215
      %p219 = pneg %p213
      %p220 = scmp.eq.s32.totalorder %s26, 1
      %p221 = por %p219, %p220
      %p222 = scmp.ne.s32.totalorder %s214, %s217
      %p223 = scmp.eq.s32.totalorder %s26, 0
      %p224 = por %p222, %p223
      %p225 = scmp.ne.s32.totalorder %s214, %s217
      %p226 = scmp.eq.s32.totalorder %s31, 1
      %p227 = por %p225, %p226
      %p228 = scmp.ne.s32.totalorder %s217, %s218
      %p229 = scmp.eq.s32.totalorder %s31, 0
      %p230 = por %p228, %p229
      %p231 = scmp.ne.s32.totalorder %s217, %s218
      %p232 = scmp.eq.s32.totalorder %s32, 1
      %p233 = por %p231, %p232
      %p235 = scmp.ne.s32.totalorder %s218, %s234
      %p236 = scmp.eq.s32.totalorder %s32, 0
      %p237 = por %p235, %p236
      %s238 = ssub.s32 %s26, %s33
      %p239 = scmp.eq.s32.totalorder %s238, 0
      %s241 = sadd.s32 %s240, 1
      %s242 = scalar_select %p239, %s240, %s241
      %p245 = pneg %p239
      %p246 = scmp.eq.s32.totalorder %s26, 1
      %p247 = por %p245, %p246
      %p248 = scmp.ne.s32.totalorder %s240, %s243
      %p249 = scmp.eq.s32.totalorder %s26, 0
      %p250 = por %p248, %p249
      %p251 = scmp.ne.s32.totalorder %s240, %s243
      %p252 = scmp.eq.s32.totalorder %s31, 1
      %p253 = por %p251, %p252
      %p254 = scmp.ne.s32.totalorder %s243, %s244
      %p255 = scmp.eq.s32.totalorder %s31, 0
      %p256 = por %p254, %p255
      %p257 = scmp.ne.s32.totalorder %s243, %s244
      %p258 = scmp.eq.s32.totalorder %s32, 1
      %p259 = por %p257, %p258
      %p261 = scmp.ne.s32.totalorder %s244, %s260
      %p262 = scmp.eq.s32.totalorder %s32, 0
      %p263 = por %p261, %p262
      %s264 = ssub.s32 %s26, %s33
      %p265 = scmp.eq.s32.totalorder %s264, 0
      %s267 = sadd.s32 %s266, 1
      %s268 = scalar_select %p265, %s266, %s267
      %p271 = pneg %p265
      %p272 = scmp.eq.s32.totalorder %s26, 1
      %p273 = por %p271, %p272
      %p274 = scmp.ne.s32.totalorder %s266, %s269
      %p275 = scmp.eq.s32.totalorder %s26, 0
      %p276 = por %p274, %p275
      %p277 = scmp.ne.s32.totalorder %s266, %s269
      %p278 = scmp.eq.s32.totalorder %s31, 1
      %p279 = por %p277, %p278
      %p280 = scmp.ne.s32.totalorder %s269, %s270
      %p281 = scmp.eq.s32.totalorder %s31, 0
      %p282 = por %p280, %p281
      %p283 = scmp.ne.s32.totalorder %s269, %s270
      %p284 = scmp.eq.s32.totalorder %s32, 1
      %p285 = por %p283, %p284
      %p287 = scmp.ne.s32.totalorder %s270, %s286
      %p288 = scmp.eq.s32.totalorder %s32, 0
      %p289 = por %p287, %p288
      %s290 = ssub.s32 %s26, %s33
      %p291 = scmp.eq.s32.totalorder %s290, 0
      %s293 = sadd.s32 %s292, 1
      %s294 = scalar_select %p291, %s292, %s293
      %p297 = pneg %p291
      %p298 = scmp.eq.s32.totalorder %s26, 1
      %p299 = por %p297, %p298
      %p300 = scmp.ne.s32.totalorder %s292, %s295
      %p301 = scmp.eq.s32.totalorder %s26, 0
      %p302 = por %p300, %p301
      %p303 = scmp.ne.s32.totalorder %s292, %s295
      %p304 = scmp.eq.s32.totalorder %s31, 1
      %p305 = por %p303, %p304
      %p306 = scmp.ne.s32.totalorder %s295, %s296
      %p307 = scmp.eq.s32.totalorder %s31, 0
      %p308 = por %p306, %p307
      %p309 = scmp.ne.s32.totalorder %s295, %s296
      %p310 = scmp.eq.s32.totalorder %s32, 1
      %p311 = por %p309, %p310
      %p313 = scmp.ne.s32.totalorder %s296, %s312
      %p314 = scmp.eq.s32.totalorder %s32, 0
      %p315 = por %p313, %p314
      %s317 = sadd.s32 %s316, 1
      %p320 = scmp.eq.s32.totalorder %s26, 1
      %p321 = scmp.ne.s32.totalorder %s316, %s318
      %p322 = scmp.eq.s32.totalorder %s26, 0
      %p323 = por %p321, %p322
      %p324 = scmp.ne.s32.totalorder %s316, %s318
      %p325 = scmp.eq.s32.totalorder %s31, 1
      %p326 = por %p324, %p325
      %p327 = scmp.ne.s32.totalorder %s318, %s319
      %p328 = scmp.eq.s32.totalorder %s31, 0
      %p329 = por %p327, %p328
      %p330 = scmp.ne.s32.totalorder %s318, %s319
      %p331 = scmp.eq.s32.totalorder %s32, 1
      %p332 = por %p330, %p331
      %p334 = scmp.ne.s32.totalorder %s319, %s333
      %p335 = scmp.eq.s32.totalorder %s32, 0
      %p336 = por %p334, %p335
      %p337 = scmp.le.s32.totalorder 1, %s26
      %p338 = scmp.lt.s32.totalorder %s26, 3
      %p339 = pnand %p337, %p338
      %p340 = pneg %p339
      // Predicated region
      $region9: #{llama_forward.1} parent=5 // pred_check
        _
      $region10: #{llama_forward.1} parent=5 // pred_check_branch
        %342 = sbr.rel (%p339) target = $region12
      $region11: #{llama_forward.1} parent=5 // pred_region
        %s343 = ssub.s32 %s26, 1
        // Predicated region
        $region13: #{llama_forward.1} parent=11 // pred_check
          %p344 = pneg %p47
        $region14: #{llama_forward.1} parent=11 // pred_check_branch
          %346 = sbr.rel (%p344) target = $region16
        $region15: #{llama_forward.1} parent=11 // pred_region
          _
        $region16: #{llama_forward.1} parent=11 // pred_fallthru
          _
        // Predicated region
        $region17: #{llama_forward.1} parent=11 // pred_check
          %p347 = pneg %p68
        $region18: #{llama_forward.1} parent=11 // pred_check_branch
          %349 = sbr.rel (%p347) target = $region20
        $region19: #{llama_forward.1} parent=11 // pred_region
          _
        $region20: #{llama_forward.1} parent=11 // pred_fallthru
          _
        // Predicated region
        $region21: #{llama_forward.1} parent=11 // pred_check
          %p350 = pneg %p89
        $region22: #{llama_forward.1} parent=11 // pred_check_branch
          %352 = sbr.rel (%p350) target = $region24
        $region23: #{llama_forward.1} parent=11 // pred_region
          _
        $region24: #{llama_forward.1} parent=11 // pred_fallthru
          _
        // Predicated region
        $region25: #{llama_forward.1} parent=11 // pred_check
          %p353 = pneg %p110
        $region26: #{llama_forward.1} parent=11 // pred_check_branch
          %355 = sbr.rel (%p353) target = $region28
        $region27: #{llama_forward.1} parent=11 // pred_region
          _
        $region28: #{llama_forward.1} parent=11 // pred_fallthru
          _
        // Predicated region
        $region29: #{llama_forward.1} parent=11 // pred_check
          %p356 = pneg %p131
        $region30: #{llama_forward.1} parent=11 // pred_check_branch
          %358 = sbr.rel (%p356) target = $region32
        $region31: #{llama_forward.1} parent=11 // pred_region
          _
        $region32: #{llama_forward.1} parent=11 // pred_fallthru
          _
        // Predicated region
        $region33: #{llama_forward.1} parent=11 // pred_check
          %p359 = pneg %p152
        $region34: #{llama_forward.1} parent=11 // pred_check_branch
          %361 = sbr.rel (%p359) target = $region36
        $region35: #{llama_forward.1} parent=11 // pred_region
          %363 = vsyncadd [#allocation4], 0
          %s364 = sshll.u32 %s5, 4
          %s365 = int_to_ptr.hbm [resolvable:$true] %s364
          %s366 = sshll.u32 [#allocation3], 4
          %s367 = int_to_ptr.vmem [resolvable:$true] %s366
          %372 = dma.hbm_to_vmem [thread:$0]  %s365, 2048, %s367, [#allocation4], 128, 128, 8
        $region36: #{llama_forward.1} parent=11 // pred_fallthru
          _
      $region12: #{llama_forward.1} parent=5 // pred_fallthru
        _
      %p373 = scmp.lt.s32.totalorder %s26, 2
      // Predicated region
      $region37: #{llama_forward.1} parent=5 // pred_check
        %p374 = pneg %p373
      $region38: #{llama_forward.1} parent=5 // pred_check_branch
        %376 = sbr.rel (%p374) target = $region40
      $region39: #{llama_forward.1} parent=5 // pred_region
        // Predicated region
        $region41: #{llama_forward.1} parent=39 // pred_check
          %p377 = pneg %p172
        $region42: #{llama_forward.1} parent=39 // pred_check_branch
          %379 = sbr.rel (%p377) target = $region44
        $region43: #{llama_forward.1} parent=39 // pred_region
          %p380 = scmp.lt.s32.totalorder %s26, 1
          %s381 = scalar_select %p380, %s26, 1
          %s382 = scalar_lea.vmem %s6, %s381
        $region44: #{llama_forward.1} parent=39 // pred_fallthru
          _
        // Predicated region
        $region45: #{llama_forward.1} parent=39 // pred_check
          %p383 = pneg %p198
        $region46: #{llama_forward.1} parent=39 // pred_check_branch
          %385 = sbr.rel (%p383) target = $region48
        $region47: #{llama_forward.1} parent=39 // pred_region
          %s386 = sand.u32 %s26, 1
          %s387 = scalar_lea.sflag [#allocation7], %s386
          %s388 = sand.u32 %s188, 1
          %s389 = smul.addr %s388, 192
          %s390 = scalar_lea.vmem [#allocation6], %s389
          %392 = vsyncadd %s387, 0
          %s393 = smul.addr %s26, 48
          %s394 = smul.addr %s393, 4
          %s395 = scalar_lea.hbm %s7, %s394
          %s396 = sshll.u32 %s395, 4
          %s397 = int_to_ptr.hbm [resolvable:$true] %s396
          %s398 = sshll.u32 %s390, 4
          %s399 = int_to_ptr.vmem [resolvable:$true] %s398
          %404 = dma.hbm_to_vmem [thread:$0]  %s397, 3072, %s399, %s387, 64, 64, 4
        $region48: #{llama_forward.1} parent=39 // pred_fallthru
          _
        // Predicated region
        $region49: #{llama_forward.1} parent=39 // pred_check
          %p405 = pneg %p224
        $region50: #{llama_forward.1} parent=39 // pred_check_branch
          %407 = sbr.rel (%p405) target = $region52
        $region51: #{llama_forward.1} parent=39 // pred_region
          %s408 = sand.u32 %s26, 1
          %s409 = scalar_lea.sflag [#allocation7], %s408
          %s410 = sand.u32 %s214, 1
          %s411 = smul.addr %s410, 64
          %s412 = scalar_lea.vmem [#allocation8], %s411
          %414 = vsyncadd %s409, 0
          %s415 = smul.addr %s26, 16
          %s416 = smul.addr %s415, 4
          %s417 = scalar_lea.hbm %s8, %s416
          %s418 = sshll.u32 %s417, 4
          %s419 = int_to_ptr.hbm [resolvable:$true] %s418
          %s420 = sshll.u32 %s412, 4
          %s421 = int_to_ptr.vmem [resolvable:$true] %s420
          %426 = dma.hbm_to_vmem [thread:$0]  %s419, 1024, %s421, %s409, 64, 64, 4
        $region52: #{llama_forward.1} parent=39 // pred_fallthru
          _
        // Predicated region
        $region53: #{llama_forward.1} parent=39 // pred_check
          %p427 = pneg %p250
        $region54: #{llama_forward.1} parent=39 // pred_check_branch
          %429 = sbr.rel (%p427) target = $region56
        $region55: #{llama_forward.1} parent=39 // pred_region
          %p430 = scmp.lt.s32.totalorder %s26, 1
          %s431 = scalar_select %p430, %s26, 1
          %s432 = scalar_lea.vmem %s9, %s431
        $region56: #{llama_forward.1} parent=39 // pred_fallthru
          _
        // Predicated region
        $region57: #{llama_forward.1} parent=39 // pred_check
          %p433 = pneg %p276
        $region58: #{llama_forward.1} parent=39 // pred_check_branch
          %435 = sbr.rel (%p433) target = $region60
        $region59: #{llama_forward.1} parent=39 // pred_region
          %s436 = sand.u32 %s266, 1
          %s437 = scalar_lea.sflag [#allocation10], %s436
          %s438 = sand.u32 %s266, 1
          %s439 = smul.addr %s438, 256
          %s440 = scalar_lea.vmem [#allocation9], %s439
          %442 = vsyncadd %s437, 0
          %s443 = smul.addr %s26, 64
          %s444 = smul.addr %s443, 4
          %s445 = scalar_lea.hbm %s10, %s444
          %s446 = sshll.u32 %s445, 4
          %s447 = int_to_ptr.hbm [resolvable:$true] %s446
          %s448 = sshll.u32 %s440, 4
          %s449 = int_to_ptr.vmem [resolvable:$true] %s448
          %454 = dma.hbm_to_vmem [thread:$0]  %s447, 4096, %s449, %s437, 256, 256, 16
        $region60: #{llama_forward.1} parent=39 // pred_fallthru
          _
        // Predicated region
        $region61: #{llama_forward.1} parent=39 // pred_check
          %p455 = pneg %p302
        $region62: #{llama_forward.1} parent=39 // pred_check_branch
          %457 = sbr.rel (%p455) target = $region64
        $region63: #{llama_forward.1} parent=39 // pred_region
          %p458 = scmp.lt.s32.totalorder %s26, 1
          %s459 = scalar_select %p458, %s26, 1
          %s460 = smul.addr %s459, 32
          %s461 = smul.addr %s460, 4
          %s462 = scalar_lea.vmem %s11, %s461
        $region64: #{llama_forward.1} parent=39 // pred_fallthru
          _
      $region40: #{llama_forward.1} parent=5 // pred_fallthru
        _
      %p463 = scmp.le.s32.totalorder 1, %s26
      %p464 = scmp.lt.s32.totalorder %s26, 3
      %p465 = pnand %p463, %p464
      %p466 = pneg %p465
      // Predicated region
      $region65: #{llama_forward.1} parent=5 // pred_check
        _
      $region66: #{llama_forward.1} parent=5 // pred_check_branch
        %468 = sbr.rel (%p465) target = $region68
      $region67: #{llama_forward.1} parent=5 // pred_region
        %s469 = ssub.s32 %s26, 1
        // Predicated region
        $region69: #{llama_forward.1} parent=67 // pred_check
          %p470 = pneg %p152
        $region70: #{llama_forward.1} parent=67 // pred_check_branch
          %472 = sbr.rel (%p470) target = $region72
        $region71: #{llama_forward.1} parent=67 // pred_region
          %474 = dma.done [#allocation4], 2048
        $region72: #{llama_forward.1} parent=67 // pred_fallthru
          _
        %s475 = sand.u32 %s31, 1
        %s476 = scalar_lea.sflag [#allocation7], %s475
        %s477 = sand.u32 %s191, 1
        %s478 = smul.addr %s477, 192
        %s479 = scalar_lea.vmem [#allocation6], %s478
        // Predicated region
        $region73: #{llama_forward.1} parent=67 // pred_check
          %p480 = pneg %p204
        $region74: #{llama_forward.1} parent=67 // pred_check_branch
          %482 = sbr.rel (%p480) target = $region76
        $region75: #{llama_forward.1} parent=67 // pred_region
          %484 = dma.done %s476, 3072
        $region76: #{llama_forward.1} parent=67 // pred_fallthru
          _
        %s485 = sand.u32 %s31, 1
        %s486 = scalar_lea.sflag [#allocation7], %s485
        %s487 = sand.u32 %s217, 1
        %s488 = smul.addr %s487, 64
        %s489 = scalar_lea.vmem [#allocation8], %s488
        // Predicated region
        $region77: #{llama_forward.1} parent=67 // pred_check
          %p490 = pneg %p230
        $region78: #{llama_forward.1} parent=67 // pred_check_branch
          %492 = sbr.rel (%p490) target = $region80
        $region79: #{llama_forward.1} parent=67 // pred_region
          %494 = dma.done %s486, 1024
        $region80: #{llama_forward.1} parent=67 // pred_fallthru
          _
        %s495 = sand.u32 %s269, 1
        %s496 = scalar_lea.sflag [#allocation10], %s495
        %s497 = sand.u32 %s269, 1
        %s498 = smul.addr %s497, 256
        %s499 = scalar_lea.vmem [#allocation9], %s498
        // Predicated region
        $region81: #{llama_forward.1} parent=67 // pred_check
          %p500 = pneg %p282
        $region82: #{llama_forward.1} parent=67 // pred_check_branch
          %502 = sbr.rel (%p500) target = $region84
        $region83: #{llama_forward.1} parent=67 // pred_region
          %504 = dma.done %s496, 4096
        $region84: #{llama_forward.1} parent=67 // pred_fallthru
          _
        %p505 = pneg %p47
        %p506 = pneg %p44
        %p507 = pneg %p68
        %p508 = pneg %p65
        %p509 = pneg %p89
        %p510 = pneg %p86
        %p511 = pneg %p110
        %p512 = pneg %p107
        %p513 = pneg %p131
        %p514 = pneg %p128
        %p515 = pneg %p152
        %p516 = pneg %p149
        %p517 = scmp.lt.s32.totalorder %s31, 1
        %s518 = scalar_select %p517, %s31, 1
        %s519 = scalar_lea.vmem %s6, %s518
        %p520 = pneg %p178
        %p521 = pneg %p175
        %s522 = sand.u32 %s31, 1
        %s523 = scalar_lea.sflag [#allocation7], %s522
        %s524 = sand.u32 %s191, 1
        %s525 = smul.addr %s524, 192
        %s526 = scalar_lea.vmem [#allocation6], %s525
        %p527 = pneg %p204
        %p528 = pneg %p201
        %s529 = sand.u32 %s31, 1
        %s530 = scalar_lea.sflag [#allocation7], %s529
        %s531 = sand.u32 %s217, 1
        %s532 = smul.addr %s531, 64
        %s533 = scalar_lea.vmem [#allocation8], %s532
        %p534 = pneg %p230
        %p535 = pneg %p227
        %p536 = scmp.lt.s32.totalorder %s31, 1
        %s537 = scalar_select %p536, %s31, 1
        %s538 = scalar_lea.vmem %s9, %s537
        %p539 = pneg %p256
        %p540 = pneg %p253
        %s541 = sand.u32 %s269, 1
        %s542 = scalar_lea.sflag [#allocation10], %s541
        %s543 = sand.u32 %s269, 1
        %s544 = smul.addr %s543, 256
        %s545 = scalar_lea.vmem [#allocation9], %s544
        %p546 = pneg %p282
        %p547 = pneg %p279
        %p548 = scmp.lt.s32.totalorder %s31, 1
        %s549 = scalar_select %p548, %s31, 1
        %s550 = smul.addr %s549, 32
        %s551 = smul.addr %s550, 4
        %s552 = scalar_lea.vmem %s11, %s551
        %p553 = pneg %p308
        %p554 = pneg %p305
        %p555 = pneg %p329
        %p556 = pneg %p326
        %p557 = scmp.lt.s32.totalorder %s31, 1
        %s558 = scalar_select %p557, %s31, 1
        %s559 = scalar_lea.vmem %s6, %s558
        %p560 = scmp.lt.s32.totalorder %s31, 1
        %s561 = scalar_select %p560, %s31, 1
        %s562 = scalar_lea.vmem %s9, %s561
        %p563 = scmp.lt.s32.totalorder %s31, 1
        %s564 = scalar_select %p563, %s31, 1
        %s565 = smul.addr %s564, 32
        %s566 = smul.addr %s565, 4
        %s567 = scalar_lea.vmem %s11, %s566
        %p569 = scmp.eq.s32.totalorder %s31, 0
        // Predicated region
        $region85: #{llama_forward.1} parent=67 // pred_check
          %p570 = pneg %p569
        $region86: #{llama_forward.1} parent=67 // pred_check_branch
          %572 = sbr.rel (%p570) target = $region88
        $region87: #{llama_forward.1} parent=67 // pred_region
          %v573 = vld [vmem:[%s0] sm:$0xff]
          %v574 = vld [vmem:[%s0 + $0x8] sm:$0xff]
          %575 = vst [vmem:[#allocation2] sm:$0xff] %v573
          %576 = vst [vmem:[#allocation2 + $0x8] sm:$0xff] %v574
        $region88: #{llama_forward.1} parent=67 // pred_fallthru
          _
        %v577 = vld [vmem:[#allocation2] sm:$0xff]
        %v578 = vld [vmem:[#allocation2 + $0x8] sm:$0xff]
        %v579 = vld [vmem:[%s1] sm:$0xff]
        %v580 = vld [vmem:[%s1 + $0x8] sm:$0xff]
        %v581 = vld [vmem:[%s2] sm:$0xff]
        %v582 = vld [vmem:[%s2 + $0x8] sm:$0xff]
        %v583 = vld [vmem:[%s2 + $0x10] sm:$0xff]
        %v584 = vld [vmem:[%s2 + $0x18] sm:$0xff]
        %v585 = vld [vmem:[%s3] sm:$0xff]
        %v586 = vld [vmem:[%s3 + $0x8] sm:$0xff]
        %v587 = vld [vmem:[%s3 + $0x10] sm:$0xff]
        %v588 = vld [vmem:[%s3 + $0x18] sm:$0xff]
        %v589 = vld [vmem:[%s559] sm:$0x1]
        %v590 = vmul.f32 %v577, %v577
        %v591 = vmul.f32 %v578, %v578
        %592 = vadd.xlane.f32.xlu0 %v590
        %v593 = vpop.xlane.xlu0 %592
        %594 = vadd.xlane.f32.xlu0 %v591
        %v595 = vpop.xlane.xlu0 %594
        %v596 = vrcp.pop 128.0
        %v597 = vmul.f32 128.0, %v596
        %v598 = vsub.f32 1.0, %v597
        %v599 = vmul.f32 %v596, %v598
        %v600 = vadd.f32 %v596, %v599
        %vm601 = vweird.f32 %v596
        %v602 = vsel %vm601, %v596, %v600
        %v603 = vmul.f32 %v593, %v602
        %v604 = vmul.f32 %v595, %v602
        %v605 = vadd.f32 %v603, 1e-06
        %v606 = vadd.f32 %v604, 1e-06
        %v607 = vrsqrt.pop %v605
        %v608 = vmul.f32 %v607, %v605
        %v609 = vmul.f32 %v608, %v607
        %v610 = vmul.f32 0.5, %v609
        %v611 = vsub.f32 1.5, %v610
        %v612 = vmul.f32 %v607, %v611
        %vm613 = vweird.f32 %v605
        %vm614 = vweird.f32 %v607
        %vm615 = vmor %vm613, %vm614
        %v616 = vsel %vm615, %v607, %v612
        %v617 = vrsqrt.pop %v606
        %v618 = vmul.f32 %v617, %v606
        %v619 = vmul.f32 %v618, %v617
        %v620 = vmul.f32 0.5, %v619
        %v621 = vsub.f32 1.5, %v620
        %v622 = vmul.f32 %v617, %v621
        %vm623 = vweird.f32 %v606
        %vm624 = vweird.f32 %v617
        %vm625 = vmor %vm623, %vm624
        %v626 = vsel %vm625, %v617, %v622
        %v627 = vmul.f32 %v577, %v616
        %v628 = vmul.f32 %v578, %v626
        %v630 = vperm.slane %v589, 0
        %v632 = vmul.f32 %v627, %v630
        %v633 = vmul.f32 %v628, %v630
        %v634 = vld [vmem:[%s479] sm:$0xf]
        %v635 = vld [vmem:[%s479 + $0x4] sm:$0xf]
        %v636 = vld [vmem:[%s479 + $0x8] sm:$0xf]
        %v637 = vld [vmem:[%s479 + $0xc] sm:$0xf]
        %v638 = vld [vmem:[%s479 + $0x10] sm:$0xf]
        %v639 = vld [vmem:[%s479 + $0x14] sm:$0xf]
        %v640 = vld [vmem:[%s479 + $0x18] sm:$0xf]
        %v641 = vld [vmem:[%s479 + $0x1c] sm:$0xf]
        %v642 = vld [vmem:[%s479 + $0x20] sm:$0xf]
        %v643 = vld [vmem:[%s479 + $0x24] sm:$0xf]
        %v644 = vld [vmem:[%s479 + $0x28] sm:$0xf]
        %v645 = vld [vmem:[%s479 + $0x2c] sm:$0xf]
        %v646 = vld [vmem:[%s479 + $0x30] sm:$0xf]
        %v647 = vld [vmem:[%s479 + $0x34] sm:$0xf]
        %v648 = vld [vmem:[%s479 + $0x38] sm:$0xf]
        %v649 = vld [vmem:[%s479 + $0x3c] sm:$0xf]
        %v650 = vld [vmem:[%s479 + $0x40] sm:$0xf]
        %v651 = vld [vmem:[%s479 + $0x44] sm:$0xf]
        %v652 = vld [vmem:[%s479 + $0x48] sm:$0xf]
        %v653 = vld [vmem:[%s479 + $0x4c] sm:$0xf]
        %v654 = vld [vmem:[%s479 + $0x50] sm:$0xf]
        %v655 = vld [vmem:[%s479 + $0x54] sm:$0xf]
        %v656 = vld [vmem:[%s479 + $0x58] sm:$0xf]
        %v657 = vld [vmem:[%s479 + $0x5c] sm:$0xf]
        %v658 = vld [vmem:[%s479 + $0x60] sm:$0xf]
        %v659 = vld [vmem:[%s479 + $0x64] sm:$0xf]
        %v660 = vld [vmem:[%s479 + $0x68] sm:$0xf]
        %v661 = vld [vmem:[%s479 + $0x6c] sm:$0xf]
        %v662 = vld [vmem:[%s479 + $0x70] sm:$0xf]
        %v663 = vld [vmem:[%s479 + $0x74] sm:$0xf]
        %v664 = vld [vmem:[%s479 + $0x78] sm:$0xf]
        %v665 = vld [vmem:[%s479 + $0x7c] sm:$0xf]
        %v666 = vld [vmem:[%s479 + $0x80] sm:$0xf]
        %v667 = vld [vmem:[%s479 + $0x84] sm:$0xf]
        %v668 = vld [vmem:[%s479 + $0x88] sm:$0xf]
        %v669 = vld [vmem:[%s479 + $0x8c] sm:$0xf]
        %v670 = vld [vmem:[%s479 + $0x90] sm:$0xf]
        %v671 = vld [vmem:[%s479 + $0x94] sm:$0xf]
        %v672 = vld [vmem:[%s479 + $0x98] sm:$0xf]
        %v673 = vld [vmem:[%s479 + $0x9c] sm:$0xf]
        %v674 = vld [vmem:[%s479 + $0xa0] sm:$0xf]
        %v675 = vld [vmem:[%s479 + $0xa4] sm:$0xf]
        %v676 = vld [vmem:[%s479 + $0xa8] sm:$0xf]
        %v677 = vld [vmem:[%s479 + $0xac] sm:$0xf]
        %v678 = vld [vmem:[%s479 + $0xb0] sm:$0xf]
        %v679 = vld [vmem:[%s479 + $0xb4] sm:$0xf]
        %v680 = vld [vmem:[%s479 + $0xb8] sm:$0xf]
        %v681 = vld [vmem:[%s479 + $0xbc] sm:$0xf]
        %v682 = vpack.c.bf16 %v633, %v632
        %v731 = vunpack.c.l.b16 %v634
        %v732 = vunpack.c.l.b16 %v635
        %v733 = vunpack.c.l.b16 %v636
        %v734 = vunpack.c.l.b16 %v637
        %v735 = vunpack.c.l.b16 %v638
        %v736 = vunpack.c.l.b16 %v639
        %v737 = vunpack.c.l.b16 %v640
        %v738 = vunpack.c.l.b16 %v641
        %v739 = vunpack.c.l.b16 %v642
        %v740 = vunpack.c.l.b16 %v643
        %v741 = vunpack.c.l.b16 %v644
        %v742 = vunpack.c.l.b16 %v645
        %v743 = vunpack.c.l.b16 %v646
        %v744 = vunpack.c.l.b16 %v647
        %v745 = vunpack.c.l.b16 %v648
        %v746 = vunpack.c.l.b16 %v649
        %v747 = vunpack.c.l.b16 %v650
        %v748 = vunpack.c.l.b16 %v651
        %v749 = vunpack.c.l.b16 %v652
        %v750 = vunpack.c.l.b16 %v653
        %v751 = vunpack.c.l.b16 %v654
        %v752 = vunpack.c.l.b16 %v655
        %v753 = vunpack.c.l.b16 %v656
        %v754 = vunpack.c.l.b16 %v657
        %v755 = vunpack.c.l.b16 %v658
        %v756 = vunpack.c.l.b16 %v659
        %v757 = vunpack.c.l.b16 %v660
        %v758 = vunpack.c.l.b16 %v661
        %v759 = vunpack.c.l.b16 %v662
        %v760 = vunpack.c.l.b16 %v663
        %v761 = vunpack.c.l.b16 %v664
        %v762 = vunpack.c.l.b16 %v665
        %v763 = vunpack.c.l.b16 %v666
        %v764 = vunpack.c.l.b16 %v667
        %v765 = vunpack.c.l.b16 %v668
        %v766 = vunpack.c.l.b16 %v669
        %v767 = vunpack.c.l.b16 %v670
        %v768 = vunpack.c.l.b16 %v671
        %v769 = vunpack.c.l.b16 %v672
        %v770 = vunpack.c.l.b16 %v673
        %v771 = vunpack.c.l.b16 %v674
        %v772 = vunpack.c.l.b16 %v675
        %v773 = vunpack.c.l.b16 %v676
        %v774 = vunpack.c.l.b16 %v677
        %v775 = vunpack.c.l.b16 %v678
        %v776 = vunpack.c.l.b16 %v679
        %v777 = vunpack.c.l.b16 %v680
        %v778 = vunpack.c.l.b16 %v681
        %v779 = vpack.c.b16 %v732, %v731
        %v780 = vpack.c.b16 %v734, %v733
        %v781 = vpack.c.b16 %v736, %v735
        %v782 = vpack.c.b16 %v738, %v737
        %v783 = vpack.c.b16 %v740, %v739
        %v784 = vpack.c.b16 %v742, %v741
        %v785 = vpack.c.b16 %v744, %v743
        %v786 = vpack.c.b16 %v746, %v745
        %v787 = vpack.c.b16 %v748, %v747
        %v788 = vpack.c.b16 %v750, %v749
        %v789 = vpack.c.b16 %v752, %v751
        %v790 = vpack.c.b16 %v754, %v753
        %v791 = vpack.c.b16 %v756, %v755
        %v792 = vpack.c.b16 %v758, %v757
        %v793 = vpack.c.b16 %v760, %v759
        %v794 = vpack.c.b16 %v762, %v761
        %v795 = vpack.c.b16 %v764, %v763
        %v796 = vpack.c.b16 %v766, %v765
        %v797 = vpack.c.b16 %v768, %v767
        %v798 = vpack.c.b16 %v770, %v769
        %v799 = vpack.c.b16 %v772, %v771
        %v800 = vpack.c.b16 %v774, %v773
        %v801 = vpack.c.b16 %v776, %v775
        %v802 = vpack.c.b16 %v778, %v777
        %827 = vmatpush.bf16.xpose.msra.mxu0 0
        %828 = vmatpush.bf16.xpose.msra.mxu0 0
        %829 = vmatpush.bf16.xpose.msra.mxu0 0
        %830 = vmatpush.bf16.xpose.msra.mxu0 0
        %831 = vmatpush.bf16.xpose.msra.mxu0 0
        %832 = vmatpush.bf16.xpose.msra.mxu0 0
        %833 = vmatpush.bf16.xpose.msra.mxu0 0
        %834 = vmatpush.bf16.xpose.msra.mxu0 %v682
        %835 = vmatmul.bf16.gmra.mxu0 %v779
        %v836 = vpop.f32.mrf.mxu0
        %v837 = vadd.f32 0.0, %v836
        %v838 = vpop.f32.mrf.mxu0
        %v839 = vadd.f32 0.0, %v838
        %840 = vmatmul.bf16.gmra.mxu0 %v780
        %v841 = vpop.f32.mrf.mxu0
        %v842 = vadd.f32 0.0, %v841
        %v843 = vpop.f32.mrf.mxu0
        %v844 = vadd.f32 0.0, %v843
        %845 = vmatmul.bf16.gmra.mxu0 %v781
        %v846 = vpop.f32.mrf.mxu0
        %v847 = vadd.f32 0.0, %v846
        %v848 = vpop.f32.mrf.mxu0
        %v849 = vadd.f32 0.0, %v848
        %850 = vmatmul.bf16.gmra.mxu0 %v782
        %v851 = vpop.f32.mrf.mxu0
        %v852 = vadd.f32 0.0, %v851
        %v853 = vpop.f32.mrf.mxu0
        %v854 = vadd.f32 0.0, %v853
        %855 = vmatmul.bf16.gmra.mxu0 %v783
        %v856 = vpop.f32.mrf.mxu0
        %v857 = vadd.f32 0.0, %v856
        %v858 = vpop.f32.mrf.mxu0
        %v859 = vadd.f32 0.0, %v858
        %860 = vmatmul.bf16.gmra.mxu0 %v784
        %v861 = vpop.f32.mrf.mxu0
        %v862 = vadd.f32 0.0, %v861
        %v863 = vpop.f32.mrf.mxu0
        %v864 = vadd.f32 0.0, %v863
        %865 = vmatmul.bf16.gmra.mxu0 %v785
        %v866 = vpop.f32.mrf.mxu0
        %v867 = vadd.f32 0.0, %v866
        %v868 = vpop.f32.mrf.mxu0
        %v869 = vadd.f32 0.0, %v868
        %870 = vmatmul.bf16.gmra.mxu0 %v786
        %v871 = vpop.f32.mrf.mxu0
        %v872 = vadd.f32 0.0, %v871
        %v873 = vpop.f32.mrf.mxu0
        %v874 = vadd.f32 0.0, %v873
        %875 = vmatmul.bf16.gmra.mxu0 %v787
        %v876 = vpop.f32.mrf.mxu0
        %v877 = vadd.f32 0.0, %v876
        %v878 = vpop.f32.mrf.mxu0
        %v879 = vadd.f32 0.0, %v878
        %880 = vmatmul.bf16.gmra.mxu0 %v788
        %v881 = vpop.f32.mrf.mxu0
        %v882 = vadd.f32 0.0, %v881
        %v883 = vpop.f32.mrf.mxu0
        %v884 = vadd.f32 0.0, %v883
        %885 = vmatmul.bf16.gmra.mxu0 %v789
        %v886 = vpop.f32.mrf.mxu0
        %v887 = vadd.f32 0.0, %v886
        %v888 = vpop.f32.mrf.mxu0
        %v889 = vadd.f32 0.0, %v888
        %890 = vmatmul.bf16.gmra.mxu0 %v790
        %v891 = vpop.f32.mrf.mxu0
        %v892 = vadd.f32 0.0, %v891
        %v893 = vpop.f32.mrf.mxu0
        %v894 = vadd.f32 0.0, %v893
        %895 = vmatmul.bf16.gmra.mxu0 %v791
        %v896 = vpop.f32.mrf.mxu0
        %v897 = vadd.f32 0.0, %v896
        %v898 = vpop.f32.mrf.mxu0
        %v899 = vadd.f32 0.0, %v898
        %900 = vmatmul.bf16.gmra.mxu0 %v792
        %v901 = vpop.f32.mrf.mxu0
        %v902 = vadd.f32 0.0, %v901
        %v903 = vpop.f32.mrf.mxu0
        %v904 = vadd.f32 0.0, %v903
        %905 = vmatmul.bf16.gmra.mxu0 %v793
        %v906 = vpop.f32.mrf.mxu0
        %v907 = vadd.f32 0.0, %v906
        %v908 = vpop.f32.mrf.mxu0
        %v909 = vadd.f32 0.0, %v908
        %910 = vmatmul.bf16.gmra.mxu0 %v794
        %v911 = vpop.f32.mrf.mxu0
        %v912 = vadd.f32 0.0, %v911
        %v913 = vpop.f32.mrf.mxu0
        %v914 = vadd.f32 0.0, %v913
        %915 = vmatmul.bf16.gmra.mxu0 %v795
        %v916 = vpop.f32.mrf.mxu0
        %v917 = vadd.f32 0.0, %v916
        %v918 = vpop.f32.mrf.mxu0
        %v919 = vadd.f32 0.0, %v918
        %920 = vmatmul.bf16.gmra.mxu0 %v796
        %v921 = vpop.f32.mrf.mxu0
        %v922 = vadd.f32 0.0, %v921
        %v923 = vpop.f32.mrf.mxu0
        %v924 = vadd.f32 0.0, %v923
        %925 = vmatmul.bf16.gmra.mxu0 %v797
        %v926 = vpop.f32.mrf.mxu0
        %v927 = vadd.f32 0.0, %v926
        %v928 = vpop.f32.mrf.mxu0
        %v929 = vadd.f32 0.0, %v928
        %930 = vmatmul.bf16.gmra.mxu0 %v798
        %v931 = vpop.f32.mrf.mxu0
        %v932 = vadd.f32 0.0, %v931
        %v933 = vpop.f32.mrf.mxu0
        %v934 = vadd.f32 0.0, %v933
        %935 = vmatmul.bf16.gmra.mxu0 %v799
        %v936 = vpop.f32.mrf.mxu0
        %v937 = vadd.f32 0.0, %v936
        %v938 = vpop.f32.mrf.mxu0
        %v939 = vadd.f32 0.0, %v938
        %940 = vmatmul.bf16.gmra.mxu0 %v800
        %v941 = vpop.f32.mrf.mxu0
        %v942 = vadd.f32 0.0, %v941
        %v943 = vpop.f32.mrf.mxu0
        %v944 = vadd.f32 0.0, %v943
        %945 = vmatmul.bf16.gmra.mxu0 %v801
        %v946 = vpop.f32.mrf.mxu0
        %v947 = vadd.f32 0.0, %v946
        %v948 = vpop.f32.mrf.mxu0
        %v949 = vadd.f32 0.0, %v948
        %950 = vmatmul.bf16.gmra.mxu0 %v802
        %v951 = vpop.f32.mrf.mxu0
        %v952 = vadd.f32 0.0, %v951
        %v953 = vpop.f32.mrf.mxu0
        %v954 = vadd.f32 0.0, %v953
        %955 = vdwg.mxu0
        %v956 = vsub.f32 0.0, %v842
        %v957 = vsub.f32 0.0, %v844
        %v958 = vsub.f32 0.0, %v852
        %v959 = vsub.f32 0.0, %v854
        %v960 = vsub.f32 0.0, %v862
        %v961 = vsub.f32 0.0, %v864
        %v962 = vsub.f32 0.0, %v872
        %v963 = vsub.f32 0.0, %v874
        %v964 = vmul.f32 %v837, %v581
        %v965 = vmul.f32 %v839, %v582
        %v966 = vmul.f32 %v842, %v583
        %v967 = vmul.f32 %v844, %v584
        %v968 = vmul.f32 %v847, %v581
        %v969 = vmul.f32 %v849, %v582
        %v970 = vmul.f32 %v852, %v583
        %v971 = vmul.f32 %v854, %v584
        %v972 = vmul.f32 %v857, %v581
        %v973 = vmul.f32 %v859, %v582
        %v974 = vmul.f32 %v862, %v583
        %v975 = vmul.f32 %v864, %v584
        %v976 = vmul.f32 %v867, %v581
        %v977 = vmul.f32 %v869, %v582
        %v978 = vmul.f32 %v872, %v583
        %v979 = vmul.f32 %v874, %v584
        %v980 = vmul.f32 %v956, %v585
        %v981 = vmul.f32 %v957, %v586
        %v982 = vmul.f32 %v837, %v587
        %v983 = vmul.f32 %v839, %v588
        %v984 = vmul.f32 %v958, %v585
        %v985 = vmul.f32 %v959, %v586
        %v986 = vmul.f32 %v847, %v587
        %v987 = vmul.f32 %v849, %v588
        %v988 = vmul.f32 %v960, %v585
        %v989 = vmul.f32 %v961, %v586
        %v990 = vmul.f32 %v857, %v587
        %v991 = vmul.f32 %v859, %v588
        %v992 = vmul.f32 %v962, %v585
        %v993 = vmul.f32 %v963, %v586
        %v994 = vmul.f32 %v867, %v587
        %v995 = vmul.f32 %v869, %v588
        %v996 = vadd.f32 %v964, %v980
        %v997 = vadd.f32 %v965, %v981
        %v998 = vadd.f32 %v966, %v982
        %v999 = vadd.f32 %v967, %v983
        %v1000 = vadd.f32 %v968, %v984
        %v1001 = vadd.f32 %v969, %v985
        %v1002 = vadd.f32 %v970, %v986
        %v1003 = vadd.f32 %v971, %v987
        %v1004 = vadd.f32 %v972, %v988
        %v1005 = vadd.f32 %v973, %v989
        %v1006 = vadd.f32 %v974, %v990
        %v1007 = vadd.f32 %v975, %v991
        %v1008 = vadd.f32 %v976, %v992
        %v1009 = vadd.f32 %v977, %v993
        %v1010 = vadd.f32 %v978, %v994
        %v1011 = vadd.f32 %v979, %v995
        %v1012 = vsub.f32 0.0, %v882
        %v1013 = vsub.f32 0.0, %v884
        %v1014 = vsub.f32 0.0, %v892
        %v1015 = vsub.f32 0.0, %v894
        %v1016 = vsub.f32 0.0, %v902
        %v1017 = vsub.f32 0.0, %v904
        %v1018 = vsub.f32 0.0, %v912
        %v1019 = vsub.f32 0.0, %v914
        %v1020 = vmul.f32 %v877, %v581
        %v1021 = vmul.f32 %v879, %v582
        %v1022 = vmul.f32 %v882, %v583
        %v1023 = vmul.f32 %v884, %v584
        %v1024 = vmul.f32 %v887, %v581
        %v1025 = vmul.f32 %v889, %v582
        %v1026 = vmul.f32 %v892, %v583
        %v1027 = vmul.f32 %v894, %v584
        %v1028 = vmul.f32 %v897, %v581
        %v1029 = vmul.f32 %v899, %v582
        %v1030 = vmul.f32 %v902, %v583
        %v1031 = vmul.f32 %v904, %v584
        %v1032 = vmul.f32 %v907, %v581
        %v1033 = vmul.f32 %v909, %v582
        %v1034 = vmul.f32 %v912, %v583
        %v1035 = vmul.f32 %v914, %v584
        %v1036 = vmul.f32 %v1012, %v585
        %v1037 = vmul.f32 %v1013, %v586
        %v1038 = vmul.f32 %v877, %v587
        %v1039 = vmul.f32 %v879, %v588
        %v1040 = vmul.f32 %v1014, %v585
        %v1041 = vmul.f32 %v1015, %v586
        %v1042 = vmul.f32 %v887, %v587
        %v1043 = vmul.f32 %v889, %v588
        %v1044 = vmul.f32 %v1016, %v585
        %v1045 = vmul.f32 %v1017, %v586
        %v1046 = vmul.f32 %v897, %v587
        %v1047 = vmul.f32 %v899, %v588
        %v1048 = vmul.f32 %v1018, %v585
        %v1049 = vmul.f32 %v1019, %v586
        %v1050 = vmul.f32 %v907, %v587
        %v1051 = vmul.f32 %v909, %v588
        %v1052 = vadd.f32 %v1020, %v1036
        %v1053 = vadd.f32 %v1021, %v1037
        %v1054 = vadd.f32 %v1022, %v1038
        %v1055 = vadd.f32 %v1023, %v1039
        %v1056 = vadd.f32 %v1024, %v1040
        %v1057 = vadd.f32 %v1025, %v1041
        %v1058 = vadd.f32 %v1026, %v1042
        %v1059 = vadd.f32 %v1027, %v1043
        %v1060 = vadd.f32 %v1028, %v1044
        %v1061 = vadd.f32 %v1029, %v1045
        %v1062 = vadd.f32 %v1030, %v1046
        %v1063 = vadd.f32 %v1031, %v1047
        %v1064 = vadd.f32 %v1032, %v1048
        %v1065 = vadd.f32 %v1033, %v1049
        %v1066 = vadd.f32 %v1034, %v1050
        %v1067 = vadd.f32 %v1035, %v1051
        %1068 = vxpose.xlu0.b32.start [1/16] %v996, 128
        %1069 = vxpose.xlu0.b32.cont [2/16] %v997, 128
        %1070 = vxpose.xlu0.b32.cont [3/16] %v998, 128
        %1071 = vxpose.xlu0.b32.cont [4/16] %v999, 128
        %1072 = vxpose.xlu0.b32.cont [5/16] 0.0, 128
        %1073 = vxpose.xlu0.b32.cont [6/16] 0.0, 128
        %1074 = vxpose.xlu0.b32.cont [7/16] 0.0, 128
        %1075 = vxpose.xlu0.b32.cont [8/16] 0.0, 128
        %1076 = vxpose.xlu0.b32.cont [9/16] 0.0, 128
        %1077 = vxpose.xlu0.b32.cont [10/16] 0.0, 128
        %1078 = vxpose.xlu0.b32.cont [11/16] 0.0, 128
        %1079 = vxpose.xlu0.b32.cont [12/16] 0.0, 128
        %1080 = vxpose.xlu0.b32.cont [13/16] 0.0, 128
        %1081 = vxpose.xlu0.b32.cont [14/16] 0.0, 128
        %1082 = vxpose.xlu0.b32.cont [15/16] 0.0, 128
        %1083 = vxpose.xlu0.b32.end [16/16] 0.0, 128
        %v1084 = vpop.trf.xlu0
        %v1085 = vpop.trf.xlu0
        %v1086 = vpop.trf.xlu0
        %v1087 = vpop.trf.xlu0
        %v1088 = vpop.trf.xlu0
        %v1089 = vpop.trf.xlu0
        %v1090 = vpop.trf.xlu0
        %v1091 = vpop.trf.xlu0
        %v1092 = vpop.trf.xlu0
        %v1093 = vpop.trf.xlu0
        %v1094 = vpop.trf.xlu0
        %v1095 = vpop.trf.xlu0
        %v1096 = vpop.trf.xlu0
        %v1097 = vpop.trf.xlu0
        %v1098 = vpop.trf.xlu0
        %v1099 = vpop.trf.xlu0
        %1100 = vxpose.xlu0.b32.start [1/16] %v1000, 128
        %1101 = vxpose.xlu0.b32.cont [2/16] %v1001, 128
        %1102 = vxpose.xlu0.b32.cont [3/16] %v1002, 128
        %1103 = vxpose.xlu0.b32.cont [4/16] %v1003, 128
        %1104 = vxpose.xlu0.b32.cont [5/16] 0.0, 128
        %1105 = vxpose.xlu0.b32.cont [6/16] 0.0, 128
        %1106 = vxpose.xlu0.b32.cont [7/16] 0.0, 128
        %1107 = vxpose.xlu0.b32.cont [8/16] 0.0, 128
        %1108 = vxpose.xlu0.b32.cont [9/16] 0.0, 128
        %1109 = vxpose.xlu0.b32.cont [10/16] 0.0, 128
        %1110 = vxpose.xlu0.b32.cont [11/16] 0.0, 128
        %1111 = vxpose.xlu0.b32.cont [12/16] 0.0, 128
        %1112 = vxpose.xlu0.b32.cont [13/16] 0.0, 128
        %1113 = vxpose.xlu0.b32.cont [14/16] 0.0, 128
        %1114 = vxpose.xlu0.b32.cont [15/16] 0.0, 128
        %1115 = vxpose.xlu0.b32.end [16/16] 0.0, 128
        %v1116 = vpop.trf.xlu0
        %v1117 = vpop.trf.xlu0
        %v1118 = vpop.trf.xlu0
        %v1119 = vpop.trf.xlu0
        %v1120 = vpop.trf.xlu0
        %v1121 = vpop.trf.xlu0
        %v1122 = vpop.trf.xlu0
        %v1123 = vpop.trf.xlu0
        %v1124 = vpop.trf.xlu0
        %v1125 = vpop.trf.xlu0
        %v1126 = vpop.trf.xlu0
        %v1127 = vpop.trf.xlu0
        %v1128 = vpop.trf.xlu0
        %v1129 = vpop.trf.xlu0
        %v1130 = vpop.trf.xlu0
        %v1131 = vpop.trf.xlu0
        %1132 = vxpose.xlu0.b32.start [1/16] %v1004, 128
        %1133 = vxpose.xlu0.b32.cont [2/16] %v1005, 128
        %1134 = vxpose.xlu0.b32.cont [3/16] %v1006, 128
        %1135 = vxpose.xlu0.b32.cont [4/16] %v1007, 128
        %1136 = vxpose.xlu0.b32.cont [5/16] 0.0, 128
        %1137 = vxpose.xlu0.b32.cont [6/16] 0.0, 128
        %1138 = vxpose.xlu0.b32.cont [7/16] 0.0, 128
        %1139 = vxpose.xlu0.b32.cont [8/16] 0.0, 128
        %1140 = vxpose.xlu0.b32.cont [9/16] 0.0, 128
        %1141 = vxpose.xlu0.b32.cont [10/16] 0.0, 128
        %1142 = vxpose.xlu0.b32.cont [11/16] 0.0, 128
        %1143 = vxpose.xlu0.b32.cont [12/16] 0.0, 128
        %1144 = vxpose.xlu0.b32.cont [13/16] 0.0, 128
        %1145 = vxpose.xlu0.b32.cont [14/16] 0.0, 128
        %1146 = vxpose.xlu0.b32.cont [15/16] 0.0, 128
        %1147 = vxpose.xlu0.b32.end [16/16] 0.0, 128
        %v1148 = vpop.trf.xlu0
        %v1149 = vpop.trf.xlu0
        %v1150 = vpop.trf.xlu0
        %v1151 = vpop.trf.xlu0
        %v1152 = vpop.trf.xlu0
        %v1153 = vpop.trf.xlu0
        %v1154 = vpop.trf.xlu0
        %v1155 = vpop.trf.xlu0
        %v1156 = vpop.trf.xlu0
        %v1157 = vpop.trf.xlu0
        %v1158 = vpop.trf.xlu0
        %v1159 = vpop.trf.xlu0
        %v1160 = vpop.trf.xlu0
        %v1161 = vpop.trf.xlu0
        %v1162 = vpop.trf.xlu0
        %v1163 = vpop.trf.xlu0
        %1164 = vxpose.xlu0.b32.start [1/16] %v1008, 128
        %1165 = vxpose.xlu0.b32.cont [2/16] %v1009, 128
        %1166 = vxpose.xlu0.b32.cont [3/16] %v1010, 128
        %1167 = vxpose.xlu0.b32.cont [4/16] %v1011, 128
        %1168 = vxpose.xlu0.b32.cont [5/16] 0.0, 128
        %1169 = vxpose.xlu0.b32.cont [6/16] 0.0, 128
        %1170 = vxpose.xlu0.b32.cont [7/16] 0.0, 128
        %1171 = vxpose.xlu0.b32.cont [8/16] 0.0, 128
        %1172 = vxpose.xlu0.b32.cont [9/16] 0.0, 128
        %1173 = vxpose.xlu0.b32.cont [10/16] 0.0, 128
        %1174 = vxpose.xlu0.b32.cont [11/16] 0.0, 128
        %1175 = vxpose.xlu0.b32.cont [12/16] 0.0, 128
        %1176 = vxpose.xlu0.b32.cont [13/16] 0.0, 128
        %1177 = vxpose.xlu0.b32.cont [14/16] 0.0, 128
        %1178 = vxpose.xlu0.b32.cont [15/16] 0.0, 128
        %1179 = vxpose.xlu0.b32.end [16/16] 0.0, 128
        %v1180 = vpop.trf.xlu0
        %v1181 = vpop.trf.xlu0
        %v1182 = vpop.trf.xlu0
        %v1183 = vpop.trf.xlu0
        %v1184 = vpop.trf.xlu0
        %v1185 = vpop.trf.xlu0
        %v1186 = vpop.trf.xlu0
        %v1187 = vpop.trf.xlu0
        %v1188 = vpop.trf.xlu0
        %v1189 = vpop.trf.xlu0
        %v1190 = vpop.trf.xlu0
        %v1191 = vpop.trf.xlu0
        %v1192 = vpop.trf.xlu0
        %v1193 = vpop.trf.xlu0
        %v1194 = vpop.trf.xlu0
        %v1195 = vpop.trf.xlu0
        %v1196 = vpack.c.bf16 %v1084, %v1084
        %v1197 = vpack.c.bf16 %v1085, %v1085
        %v1198 = vpack.c.bf16 %v1116, %v1116
        %v1199 = vpack.c.bf16 %v1117, %v1117
        %v1200 = vpack.c.bf16 %v1148, %v1148
        %v1201 = vpack.c.bf16 %v1149, %v1149
        %v1202 = vpack.c.bf16 %v1180, %v1180
        %v1203 = vpack.c.bf16 %v1181, %v1181
        %v1204 = vpack.c.bf16 %v1052, %v1052
        %v1205 = vpack.c.bf16 %v1053, %v1053
        %v1206 = vpack.c.bf16 %v1054, %v1054
        %v1207 = vpack.c.bf16 %v1055, %v1055
        %v1208 = vpack.c.bf16 %v1056, %v1056
        %v1209 = vpack.c.bf16 %v1057, %v1057
        %v1210 = vpack.c.bf16 %v1058, %v1058
        %v1211 = vpack.c.bf16 %v1059, %v1059
        %v1212 = vpack.c.bf16 %v1060, %v1060
        %v1213 = vpack.c.bf16 %v1061, %v1061
        %v1214 = vpack.c.bf16 %v1062, %v1062
        %v1215 = vpack.c.bf16 %v1063, %v1063
        %v1216 = vpack.c.bf16 %v1064, %v1064
        %v1217 = vpack.c.bf16 %v1065, %v1065
        %v1218 = vpack.c.bf16 %v1066, %v1066
        %v1219 = vpack.c.bf16 %v1067, %v1067
        %v1220 = vpack.c.bf16 %v917, %v917
        %v1221 = vpack.c.bf16 %v919, %v919
        %v1222 = vpack.c.bf16 %v922, %v922
        %v1223 = vpack.c.bf16 %v924, %v924
        %v1224 = vpack.c.bf16 %v927, %v927
        %v1225 = vpack.c.bf16 %v929, %v929
        %v1226 = vpack.c.bf16 %v932, %v932
        %v1227 = vpack.c.bf16 %v934, %v934
        %v1228 = vpack.c.bf16 %v937, %v937
        %v1229 = vpack.c.bf16 %v939, %v939
        %v1230 = vpack.c.bf16 %v942, %v942
        %v1231 = vpack.c.bf16 %v944, %v944
        %v1232 = vpack.c.bf16 %v947, %v947
        %v1233 = vpack.c.bf16 %v949, %v949
        %v1234 = vpack.c.bf16 %v952, %v952
        %v1235 = vpack.c.bf16 %v954, %v954
        %v1238 = vunpack.c.l.b16 %v1196
        %v1239 = vunpack.c.l.b16 %v1197
        %v1240 = vpack.c.b16 %v1239, %v1238
        %v1245 = vunpack.c.l.b16 %v1204
        %v1246 = vunpack.c.l.b16 %v1205
        %v1247 = vunpack.c.l.b16 %v1206
        %v1248 = vunpack.c.l.b16 %v1207
        %v1249 = vpack.c.b16 %v1246, %v1245
        %v1250 = vpack.c.b16 %v1248, %v1247
        %vm1253 = vcmask 261120
        %v1255 = vsel %vm1253, %v1240, 0
        %1257 = vmatpush.bf16.msra.mxu0 0
        %1258 = vmatpush.bf16.msra.mxu0 0
        %1259 = vmatpush.bf16.msra.mxu0 0
        %1260 = vmatpush.bf16.msra.mxu0 0
        %1261 = vmatpush.bf16.msra.mxu0 0
        %1262 = vmatpush.bf16.msra.mxu0 0
        %1263 = vmatpush.bf16.msra.mxu0 %v1250
        %1264 = vmatpush.bf16.msra.mxu0 %v1249
        %1265 = vmatmul.bf16.gmra.mxu0 %v1255
        %v1266 = vpop.f32.mrf.mxu0
        %v1267 = vadd.f32 0.0, %v1266
        %v1268 = vpop.f32.mrf.mxu0
        %v1269 = vadd.f32 0.0, %v1268
        %1270 = vdwg.mxu0
        %v1273 = vunpack.c.l.b16 %v1198
        %v1274 = vunpack.c.l.b16 %v1199
        %v1275 = vpack.c.b16 %v1274, %v1273
        %v1280 = vunpack.c.l.b16 %v1208
        %v1281 = vunpack.c.l.b16 %v1209
        %v1282 = vunpack.c.l.b16 %v1210
        %v1283 = vunpack.c.l.b16 %v1211
        %v1284 = vpack.c.b16 %v1281, %v1280
        %v1285 = vpack.c.b16 %v1283, %v1282
        %v1289 = vsel %vm1253, %v1275, 0
        %1291 = vmatpush.bf16.msra.mxu0 0
        %1292 = vmatpush.bf16.msra.mxu0 0
        %1293 = vmatpush.bf16.msra.mxu0 0
        %1294 = vmatpush.bf16.msra.mxu0 0
        %1295 = vmatpush.bf16.msra.mxu0 0
        %1296 = vmatpush.bf16.msra.mxu0 0
        %1297 = vmatpush.bf16.msra.mxu0 %v1285
        %1298 = vmatpush.bf16.msra.mxu0 %v1284
        %1299 = vmatmul.bf16.gmra.mxu0 %v1289
        %v1300 = vpop.f32.mrf.mxu0
        %v1301 = vadd.f32 0.0, %v1300
        %v1302 = vpop.f32.mrf.mxu0
        %v1303 = vadd.f32 0.0, %v1302
        %1304 = vdwg.mxu0
        %v1307 = vunpack.c.l.b16 %v1200
        %v1308 = vunpack.c.l.b16 %v1201
        %v1309 = vpack.c.b16 %v1308, %v1307
        %v1314 = vunpack.c.l.b16 %v1212
        %v1315 = vunpack.c.l.b16 %v1213
        %v1316 = vunpack.c.l.b16 %v1214
        %v1317 = vunpack.c.l.b16 %v1215
        %v1318 = vpack.c.b16 %v1315, %v1314
        %v1319 = vpack.c.b16 %v1317, %v1316
        %v1323 = vsel %vm1253, %v1309, 0
        %1325 = vmatpush.bf16.msra.mxu0 0
        %1326 = vmatpush.bf16.msra.mxu0 0
        %1327 = vmatpush.bf16.msra.mxu0 0
        %1328 = vmatpush.bf16.msra.mxu0 0
        %1329 = vmatpush.bf16.msra.mxu0 0
        %1330 = vmatpush.bf16.msra.mxu0 0
        %1331 = vmatpush.bf16.msra.mxu0 %v1319
        %1332 = vmatpush.bf16.msra.mxu0 %v1318
        %1333 = vmatmul.bf16.gmra.mxu0 %v1323
        %v1334 = vpop.f32.mrf.mxu0
        %v1335 = vadd.f32 0.0, %v1334
        %v1336 = vpop.f32.mrf.mxu0
        %v1337 = vadd.f32 0.0, %v1336
        %1338 = vdwg.mxu0
        %v1341 = vunpack.c.l.b16 %v1202
        %v1342 = vunpack.c.l.b16 %v1203
        %v1343 = vpack.c.b16 %v1342, %v1341
        %v1348 = vunpack.c.l.b16 %v1216
        %v1349 = vunpack.c.l.b16 %v1217
        %v1350 = vunpack.c.l.b16 %v1218
        %v1351 = vunpack.c.l.b16 %v1219
        %v1352 = vpack.c.b16 %v1349, %v1348
        %v1353 = vpack.c.b16 %v1351, %v1350
        %v1357 = vsel %vm1253, %v1343, 0
        %1359 = vmatpush.bf16.msra.mxu0 0
        %1360 = vmatpush.bf16.msra.mxu0 0
        %1361 = vmatpush.bf16.msra.mxu0 0
        %1362 = vmatpush.bf16.msra.mxu0 0
        %1363 = vmatpush.bf16.msra.mxu0 0
        %1364 = vmatpush.bf16.msra.mxu0 0
        %1365 = vmatpush.bf16.msra.mxu0 %v1353
        %1366 = vmatpush.bf16.msra.mxu0 %v1352
        %1367 = vmatmul.bf16.gmra.mxu0 %v1357
        %v1368 = vpop.f32.mrf.mxu0
        %v1369 = vadd.f32 0.0, %v1368
        %v1370 = vpop.f32.mrf.mxu0
        %v1371 = vadd.f32 0.0, %v1370
        %1372 = vdwg.mxu0
        %v1373 = vmul.f32 %v1267, 0.17677669
        %v1374 = vmul.f32 %v1269, 0.17677669
        %v1375 = vmul.f32 %v1301, 0.17677669
        %v1376 = vmul.f32 %v1303, 0.17677669
        %v1377 = vmul.f32 %v1335, 0.17677669
        %v1378 = vmul.f32 %v1337, 0.17677669
        %v1379 = vmul.f32 %v1369, 0.17677669
        %v1380 = vmul.f32 %v1371, 0.17677669
        %v1381 = vadd.f32 %v1373, %v579
        %v1382 = vadd.f32 %v1374, %v580
        %v1383 = vadd.f32 %v1375, %v579
        %v1384 = vadd.f32 %v1376, %v580
        %v1385 = vadd.f32 %v1377, %v579
        %v1386 = vadd.f32 %v1378, %v580
        %v1387 = vadd.f32 %v1379, %v579
        %v1388 = vadd.f32 %v1380, %v580
        %vm1389 = vcmask 130048
        %v1390 = vsel %vm1389, %v1381, -inf
        %1391 = vmax.xlane.f32.xlu0 %v1390
        %v1392 = vpop.xlane.xlu0 %1391
        %v1393 = vsel %vm1389, %v1382, -inf
        %1394 = vmax.xlane.f32.xlu0 %v1393
        %v1395 = vpop.xlane.xlu0 %1394
        %v1396 = vsel %vm1389, %v1383, -inf
        %1397 = vmax.xlane.f32.xlu0 %v1396
        %v1398 = vpop.xlane.xlu0 %1397
        %v1399 = vsel %vm1389, %v1384, -inf
        %1400 = vmax.xlane.f32.xlu0 %v1399
        %v1401 = vpop.xlane.xlu0 %1400
        %v1402 = vsel %vm1389, %v1385, -inf
        %1403 = vmax.xlane.f32.xlu0 %v1402
        %v1404 = vpop.xlane.xlu0 %1403
        %v1405 = vsel %vm1389, %v1386, -inf
        %1406 = vmax.xlane.f32.xlu0 %v1405
        %v1407 = vpop.xlane.xlu0 %1406
        %v1408 = vsel %vm1389, %v1387, -inf
        %1409 = vmax.xlane.f32.xlu0 %v1408
        %v1410 = vpop.xlane.xlu0 %1409
        %v1411 = vsel %vm1389, %v1388, -inf
        %1412 = vmax.xlane.f32.xlu0 %v1411
        %v1413 = vpop.xlane.xlu0 %1412
        %v1414 = vsub.f32 %v1381, %v1392
        %v1415 = vsub.f32 %v1382, %v1395
        %v1416 = vsub.f32 %v1383, %v1398
        %v1417 = vsub.f32 %v1384, %v1401
        %v1418 = vsub.f32 %v1385, %v1404
        %v1419 = vsub.f32 %v1386, %v1407
        %v1420 = vsub.f32 %v1387, %v1410
        %v1421 = vsub.f32 %v1388, %v1413
        %v1422 = vmul.f32 %v1414, 1.442695
        %v1423 = vpow.pop %v1422
        %v1424 = vmul.f32 %v1415, 1.442695
        %v1425 = vpow.pop %v1424
        %v1426 = vmul.f32 %v1416, 1.442695
        %v1427 = vpow.pop %v1426
        %v1428 = vmul.f32 %v1417, 1.442695
        %v1429 = vpow.pop %v1428
        %v1430 = vmul.f32 %v1418, 1.442695
        %v1431 = vpow.pop %v1430
        %v1432 = vmul.f32 %v1419, 1.442695
        %v1433 = vpow.pop %v1432
        %v1434 = vmul.f32 %v1420, 1.442695
        %v1435 = vpow.pop %v1434
        %v1436 = vmul.f32 %v1421, 1.442695
        %v1437 = vpow.pop %v1436
        %v1438 = vsel %vm1389, %v1423, 0.0
        %1439 = vadd.xlane.f32.xlu0 %v1438
        %v1440 = vpop.xlane.xlu0 %1439
        %v1441 = vsel %vm1389, %v1425, 0.0
        %1442 = vadd.xlane.f32.xlu0 %v1441
        %v1443 = vpop.xlane.xlu0 %1442
        %v1444 = vsel %vm1389, %v1427, 0.0
        %1445 = vadd.xlane.f32.xlu0 %v1444
        %v1446 = vpop.xlane.xlu0 %1445
        %v1447 = vsel %vm1389, %v1429, 0.0
        %1448 = vadd.xlane.f32.xlu0 %v1447
        %v1449 = vpop.xlane.xlu0 %1448
        %v1450 = vsel %vm1389, %v1431, 0.0
        %1451 = vadd.xlane.f32.xlu0 %v1450
        %v1452 = vpop.xlane.xlu0 %1451
        %v1453 = vsel %vm1389, %v1433, 0.0
        %1454 = vadd.xlane.f32.xlu0 %v1453
        %v1455 = vpop.xlane.xlu0 %1454
        %v1456 = vsel %vm1389, %v1435, 0.0
        %1457 = vadd.xlane.f32.xlu0 %v1456
        %v1458 = vpop.xlane.xlu0 %1457
        %v1459 = vsel %vm1389, %v1437, 0.0
        %1460 = vadd.xlane.f32.xlu0 %v1459
        %v1461 = vpop.xlane.xlu0 %1460
        %v1462 = vrcp.pop %v1440
        %v1463 = vrcp.pop %v1443
        %v1464 = vrcp.pop %v1446
        %v1465 = vrcp.pop %v1449
        %v1466 = vrcp.pop %v1452
        %v1467 = vrcp.pop %v1455
        %v1468 = vrcp.pop %v1458
        %v1469 = vrcp.pop %v1461
        %v1470 = vmul.f32 %v1423, %v1462
        %v1471 = vmul.f32 %v1425, %v1463
        %v1472 = vmul.f32 %v1427, %v1464
        %v1473 = vmul.f32 %v1429, %v1465
        %v1474 = vmul.f32 %v1431, %v1466
        %v1475 = vmul.f32 %v1433, %v1467
        %v1476 = vmul.f32 %v1435, %v1468
        %v1477 = vmul.f32 %v1437, %v1469
        %v1478 = vpack.c.bf16 %v1470, %v1470
        %v1479 = vpack.c.bf16 %v1471, %v1471
        %v1480 = vpack.c.bf16 %v1472, %v1472
        %v1481 = vpack.c.bf16 %v1473, %v1473
        %v1482 = vpack.c.bf16 %v1474, %v1474
        %v1483 = vpack.c.bf16 %v1475, %v1475
        %v1484 = vpack.c.bf16 %v1476, %v1476
        %v1485 = vpack.c.bf16 %v1477, %v1477
        %v1490 = vunpack.c.l.b16 %v1220
        %v1491 = vunpack.c.l.b16 %v1221
        %v1492 = vunpack.c.l.b16 %v1222
        %v1493 = vunpack.c.l.b16 %v1223
        %v1494 = vpack.c.b16 %v1491, %v1490
        %v1495 = vpack.c.b16 %v1493, %v1492
        %v1498 = vunpack.c.l.b16 %v1478
        %v1499 = vunpack.c.l.b16 %v1479
        %v1500 = vpack.c.b16 %v1499, %v1498
        %v1502 = vsel %vm1389, %v1494, 0
        %v1505 = vsel %vm1389, %v1495, 0
        %v1508 = vsel %vm1389, %v1500, 0
        %1510 = vmatpush.bf16.xpose.msra.mxu0 0
        %1511 = vmatpush.bf16.xpose.msra.mxu0 0
        %1512 = vmatpush.bf16.xpose.msra.mxu0 0
        %1513 = vmatpush.bf16.xpose.msra.mxu0 0
        %1514 = vmatpush.bf16.xpose.msra.mxu0 0
        %1515 = vmatpush.bf16.xpose.msra.mxu0 0
        %1516 = vmatpush.bf16.xpose.msra.mxu0 0
        %1517 = vmatpush.bf16.xpose.msra.mxu0 %v1508
        %1518 = vmatmul.bf16.gmra.mxu0 %v1502
        %v1519 = vpop.f32.mrf.mxu0
        %v1520 = vadd.f32 0.0, %v1519
        %v1521 = vpop.f32.mrf.mxu0
        %v1522 = vadd.f32 0.0, %v1521
        %1523 = vmatmul.bf16.gmra.mxu0 %v1505
        %v1524 = vpop.f32.mrf.mxu0
        %v1525 = vadd.f32 0.0, %v1524
        %v1526 = vpop.f32.mrf.mxu0
        %v1527 = vadd.f32 0.0, %v1526
        %1528 = vdwg.mxu0
        %v1533 = vunpack.c.l.b16 %v1224
        %v1534 = vunpack.c.l.b16 %v1225
        %v1535 = vunpack.c.l.b16 %v1226
        %v1536 = vunpack.c.l.b16 %v1227
        %v1537 = vpack.c.b16 %v1534, %v1533
        %v1538 = vpack.c.b16 %v1536, %v1535
        %v1541 = vunpack.c.l.b16 %v1480
        %v1542 = vunpack.c.l.b16 %v1481
        %v1543 = vpack.c.b16 %v1542, %v1541
        %v1545 = vsel %vm1389, %v1537, 0
        %v1548 = vsel %vm1389, %v1538, 0
        %v1551 = vsel %vm1389, %v1543, 0
        %1553 = vmatpush.bf16.xpose.msra.mxu0 0
        %1554 = vmatpush.bf16.xpose.msra.mxu0 0
        %1555 = vmatpush.bf16.xpose.msra.mxu0 0
        %1556 = vmatpush.bf16.xpose.msra.mxu0 0
        %1557 = vmatpush.bf16.xpose.msra.mxu0 0
        %1558 = vmatpush.bf16.xpose.msra.mxu0 0
        %1559 = vmatpush.bf16.xpose.msra.mxu0 0
        %1560 = vmatpush.bf16.xpose.msra.mxu0 %v1551
        %1561 = vmatmul.bf16.gmra.mxu0 %v1545
        %v1562 = vpop.f32.mrf.mxu0
        %v1563 = vadd.f32 0.0, %v1562
        %v1564 = vpop.f32.mrf.mxu0
        %v1565 = vadd.f32 0.0, %v1564
        %1566 = vmatmul.bf16.gmra.mxu0 %v1548
        %v1567 = vpop.f32.mrf.mxu0
        %v1568 = vadd.f32 0.0, %v1567
        %v1569 = vpop.f32.mrf.mxu0
        %v1570 = vadd.f32 0.0, %v1569
        %1571 = vdwg.mxu0
        %v1576 = vunpack.c.l.b16 %v1228
        %v1577 = vunpack.c.l.b16 %v1229
        %v1578 = vunpack.c.l.b16 %v1230
        %v1579 = vunpack.c.l.b16 %v1231
        %v1580 = vpack.c.b16 %v1577, %v1576
        %v1581 = vpack.c.b16 %v1579, %v1578
        %v1584 = vunpack.c.l.b16 %v1482
        %v1585 = vunpack.c.l.b16 %v1483
        %v1586 = vpack.c.b16 %v1585, %v1584
        %v1588 = vsel %vm1389, %v1580, 0
        %v1591 = vsel %vm1389, %v1581, 0
        %v1594 = vsel %vm1389, %v1586, 0
        %1596 = vmatpush.bf16.xpose.msra.mxu0 0
        %1597 = vmatpush.bf16.xpose.msra.mxu0 0
        %1598 = vmatpush.bf16.xpose.msra.mxu0 0
        %1599 = vmatpush.bf16.xpose.msra.mxu0 0
        %1600 = vmatpush.bf16.xpose.msra.mxu0 0
        %1601 = vmatpush.bf16.xpose.msra.mxu0 0
        %1602 = vmatpush.bf16.xpose.msra.mxu0 0
        %1603 = vmatpush.bf16.xpose.msra.mxu0 %v1594
        %1604 = vmatmul.bf16.gmra.mxu0 %v1588
        %v1605 = vpop.f32.mrf.mxu0
        %v1606 = vadd.f32 0.0, %v1605
        %v1607 = vpop.f32.mrf.mxu0
        %v1608 = vadd.f32 0.0, %v1607
        %1609 = vmatmul.bf16.gmra.mxu0 %v1591
        %v1610 = vpop.f32.mrf.mxu0
        %v1611 = vadd.f32 0.0, %v1610
        %v1612 = vpop.f32.mrf.mxu0
        %v1613 = vadd.f32 0.0, %v1612
        %1614 = vdwg.mxu0
        %v1619 = vunpack.c.l.b16 %v1232
        %v1620 = vunpack.c.l.b16 %v1233
        %v1621 = vunpack.c.l.b16 %v1234
        %v1622 = vunpack.c.l.b16 %v1235
        %v1623 = vpack.c.b16 %v1620, %v1619
        %v1624 = vpack.c.b16 %v1622, %v1621
        %v1627 = vunpack.c.l.b16 %v1484
        %v1628 = vunpack.c.l.b16 %v1485
        %v1629 = vpack.c.b16 %v1628, %v1627
        %v1631 = vsel %vm1389, %v1623, 0
        %v1634 = vsel %vm1389, %v1624, 0
        %v1637 = vsel %vm1389, %v1629, 0
        %1639 = vmatpush.bf16.xpose.msra.mxu0 0
        %1640 = vmatpush.bf16.xpose.msra.mxu0 0
        %1641 = vmatpush.bf16.xpose.msra.mxu0 0
        %1642 = vmatpush.bf16.xpose.msra.mxu0 0
        %1643 = vmatpush.bf16.xpose.msra.mxu0 0
        %1644 = vmatpush.bf16.xpose.msra.mxu0 0
        %1645 = vmatpush.bf16.xpose.msra.mxu0 0
        %1646 = vmatpush.bf16.xpose.msra.mxu0 %v1637
        %1647 = vmatmul.bf16.gmra.mxu0 %v1631
        %v1648 = vpop.f32.mrf.mxu0
        %v1649 = vadd.f32 0.0, %v1648
        %v1650 = vpop.f32.mrf.mxu0
        %v1651 = vadd.f32 0.0, %v1650
        %1652 = vmatmul.bf16.gmra.mxu0 %v1634
        %v1653 = vpop.f32.mrf.mxu0
        %v1654 = vadd.f32 0.0, %v1653
        %v1655 = vpop.f32.mrf.mxu0
        %v1656 = vadd.f32 0.0, %v1655
        %1657 = vdwg.mxu0
        %1658 = vxpose.xlu0.b32.start [1/16] %v1520, 128
        %1659 = vxpose.xlu0.b32.cont [2/16] %v1522, 128
        %1660 = vxpose.xlu0.b32.cont [3/16] %v1525, 128
        %1661 = vxpose.xlu0.b32.cont [4/16] %v1527, 128
        %1662 = vxpose.xlu0.b32.cont [5/16] %v1563, 128
        %1663 = vxpose.xlu0.b32.cont [6/16] %v1565, 128
        %1664 = vxpose.xlu0.b32.cont [7/16] %v1568, 128
        %1665 = vxpose.xlu0.b32.cont [8/16] %v1570, 128
        %1666 = vxpose.xlu0.b32.cont [9/16] %v1606, 128
        %1667 = vxpose.xlu0.b32.cont [10/16] %v1608, 128
        %1668 = vxpose.xlu0.b32.cont [11/16] %v1611, 128
        %1669 = vxpose.xlu0.b32.cont [12/16] %v1613, 128
        %1670 = vxpose.xlu0.b32.cont [13/16] %v1649, 128
        %1671 = vxpose.xlu0.b32.cont [14/16] %v1651, 128
        %1672 = vxpose.xlu0.b32.cont [15/16] %v1654, 128
        %1673 = vxpose.xlu0.b32.end [16/16] %v1656, 128
        %v1674 = vpop.trf.xlu0
        %v1675 = vpop.trf.xlu0
        %v1676 = vpop.trf.xlu0
        %v1677 = vpop.trf.xlu0
        %v1678 = vpop.trf.xlu0
        %v1679 = vpop.trf.xlu0
        %v1680 = vpop.trf.xlu0
        %v1681 = vpop.trf.xlu0
        %v1682 = vpop.trf.xlu0
        %v1683 = vpop.trf.xlu0
        %v1684 = vpop.trf.xlu0
        %v1685 = vpop.trf.xlu0
        %v1686 = vpop.trf.xlu0
        %v1687 = vpop.trf.xlu0
        %v1688 = vpop.trf.xlu0
        %v1689 = vpop.trf.xlu0
        %v1690 = vpack.c.bf16 %v1675, %v1674
        %v1691 = vld [vmem:[%s489] sm:$0xf]
        %v1692 = vld [vmem:[%s489 + $0x4] sm:$0xf]
        %v1693 = vld [vmem:[%s489 + $0x8] sm:$0xf]
        %v1694 = vld [vmem:[%s489 + $0xc] sm:$0xf]
        %v1695 = vld [vmem:[%s489 + $0x10] sm:$0xf]
        %v1696 = vld [vmem:[%s489 + $0x14] sm:$0xf]
        %v1697 = vld [vmem:[%s489 + $0x18] sm:$0xf]
        %v1698 = vld [vmem:[%s489 + $0x1c] sm:$0xf]
        %v1699 = vld [vmem:[%s489 + $0x20] sm:$0xf]
        %v1700 = vld [vmem:[%s489 + $0x24] sm:$0xf]
        %v1701 = vld [vmem:[%s489 + $0x28] sm:$0xf]
        %v1702 = vld [vmem:[%s489 + $0x2c] sm:$0xf]
        %v1703 = vld [vmem:[%s489 + $0x30] sm:$0xf]
        %v1704 = vld [vmem:[%s489 + $0x34] sm:$0xf]
        %v1705 = vld [vmem:[%s489 + $0x38] sm:$0xf]
        %v1706 = vld [vmem:[%s489 + $0x3c] sm:$0xf]
        %v1723 = vunpack.c.l.b16 %v1691
        %v1724 = vunpack.c.l.b16 %v1692
        %v1725 = vunpack.c.l.b16 %v1693
        %v1726 = vunpack.c.l.b16 %v1694
        %v1727 = vunpack.c.l.b16 %v1695
        %v1728 = vunpack.c.l.b16 %v1696
        %v1729 = vunpack.c.l.b16 %v1697
        %v1730 = vunpack.c.l.b16 %v1698
        %v1731 = vunpack.c.l.b16 %v1699
        %v1732 = vunpack.c.l.b16 %v1700
        %v1733 = vunpack.c.l.b16 %v1701
        %v1734 = vunpack.c.l.b16 %v1702
        %v1735 = vunpack.c.l.b16 %v1703
        %v1736 = vunpack.c.l.b16 %v1704
        %v1737 = vunpack.c.l.b16 %v1705
        %v1738 = vunpack.c.l.b16 %v1706
        %v1739 = vpack.c.b16 %v1724, %v1723
        %v1740 = vpack.c.b16 %v1726, %v1725
        %v1741 = vpack.c.b16 %v1728, %v1727
        %v1742 = vpack.c.b16 %v1730, %v1729
        %v1743 = vpack.c.b16 %v1732, %v1731
        %v1744 = vpack.c.b16 %v1734, %v1733
        %v1745 = vpack.c.b16 %v1736, %v1735
        %v1746 = vpack.c.b16 %v1738, %v1737
        %1755 = vmatpush.bf16.msra.mxu0 %v1746
        %1756 = vmatpush.bf16.msra.mxu0 %v1745
        %1757 = vmatpush.bf16.msra.mxu0 %v1744
        %1758 = vmatpush.bf16.msra.mxu0 %v1743
        %1759 = vmatpush.bf16.msra.mxu0 %v1742
        %1760 = vmatpush.bf16.msra.mxu0 %v1741
        %1761 = vmatpush.bf16.msra.mxu0 %v1740
        %1762 = vmatpush.bf16.msra.mxu0 %v1739
        %1763 = vmatmul.bf16.gmra.mxu0 %v1690
        %v1764 = vpop.f32.mrf.mxu0
        %v1765 = vadd.f32 0.0, %v1764
        %v1766 = vpop.f32.mrf.mxu0
        %v1767 = vadd.f32 0.0, %v1766
        %1768 = vdwg.mxu0
        %v1769 = vadd.f32 %v577, %v1765
        %v1770 = vadd.f32 %v578, %v1767
        %v1771 = vld [vmem:[%s562] sm:$0x1]
        %v1772 = vmul.f32 %v1769, %v1769
        %v1773 = vmul.f32 %v1770, %v1770
        %1774 = vadd.xlane.f32.xlu0 %v1772
        %v1775 = vpop.xlane.xlu0 %1774
        %1776 = vadd.xlane.f32.xlu0 %v1773
        %v1777 = vpop.xlane.xlu0 %1776
        %v1778 = vmul.f32 %v1775, %v602
        %v1779 = vmul.f32 %v1777, %v602
        %v1780 = vadd.f32 %v1778, 1e-06
        %v1781 = vadd.f32 %v1779, 1e-06
        %v1782 = vrsqrt.pop %v1780
        %v1783 = vmul.f32 %v1782, %v1780
        %v1784 = vmul.f32 %v1783, %v1782
        %v1785 = vmul.f32 0.5, %v1784
        %v1786 = vsub.f32 1.5, %v1785
        %v1787 = vmul.f32 %v1782, %v1786
        %vm1788 = vweird.f32 %v1780
        %vm1789 = vweird.f32 %v1782
        %vm1790 = vmor %vm1788, %vm1789
        %v1791 = vsel %vm1790, %v1782, %v1787
        %v1792 = vrsqrt.pop %v1781
        %v1793 = vmul.f32 %v1792, %v1781
        %v1794 = vmul.f32 %v1793, %v1792
        %v1795 = vmul.f32 0.5, %v1794
        %v1796 = vsub.f32 1.5, %v1795
        %v1797 = vmul.f32 %v1792, %v1796
        %vm1798 = vweird.f32 %v1781
        %vm1799 = vweird.f32 %v1792
        %vm1800 = vmor %vm1798, %vm1799
        %v1801 = vsel %vm1800, %v1792, %v1797
        %v1802 = vmul.f32 %v1769, %v1791
        %v1803 = vmul.f32 %v1770, %v1801
        %v1805 = vperm.slane %v1771, 0
        %v1807 = vmul.f32 %v1802, %v1805
        %v1808 = vmul.f32 %v1803, %v1805
        %v1809 = vpack.c.bf16 %v1808, %v1807
        %v1810 = vld [vmem:[%s499] sm:$0xff]
        %v1811 = vld [vmem:[%s499 + $0x8] sm:$0xff]
        %v1812 = vld [vmem:[%s499 + $0x10] sm:$0xff]
        %v1813 = vld [vmem:[%s499 + $0x18] sm:$0xff]
        %v1814 = vld [vmem:[%s499 + $0x20] sm:$0xff]
        %v1815 = vld [vmem:[%s499 + $0x28] sm:$0xff]
        %v1816 = vld [vmem:[%s499 + $0x30] sm:$0xff]
        %v1817 = vld [vmem:[%s499 + $0x38] sm:$0xff]
        %v1818 = vld [vmem:[%s499 + $0x40] sm:$0xff]
        %v1819 = vld [vmem:[%s499 + $0x48] sm:$0xff]
        %v1820 = vld [vmem:[%s499 + $0x50] sm:$0xff]
        %v1821 = vld [vmem:[%s499 + $0x58] sm:$0xff]
        %v1822 = vld [vmem:[%s499 + $0x60] sm:$0xff]
        %v1823 = vld [vmem:[%s499 + $0x68] sm:$0xff]
        %v1824 = vld [vmem:[%s499 + $0x70] sm:$0xff]
        %v1825 = vld [vmem:[%s499 + $0x78] sm:$0xff]
        %v1826 = vld [vmem:[%s499 + $0x80] sm:$0xff]
        %v1827 = vld [vmem:[%s499 + $0x88] sm:$0xff]
        %v1828 = vld [vmem:[%s499 + $0x90] sm:$0xff]
        %v1829 = vld [vmem:[%s499 + $0x98] sm:$0xff]
        %v1830 = vld [vmem:[%s499 + $0xa0] sm:$0xff]
        %v1831 = vld [vmem:[%s499 + $0xa8] sm:$0xff]
        %v1832 = vld [vmem:[%s499 + $0xb0] sm:$0xff]
        %v1833 = vld [vmem:[%s499 + $0xb8] sm:$0xff]
        %v1834 = vld [vmem:[%s499 + $0xc0] sm:$0xff]
        %v1835 = vld [vmem:[%s499 + $0xc8] sm:$0xff]
        %v1836 = vld [vmem:[%s499 + $0xd0] sm:$0xff]
        %v1837 = vld [vmem:[%s499 + $0xd8] sm:$0xff]
        %v1838 = vld [vmem:[%s499 + $0xe0] sm:$0xff]
        %v1839 = vld [vmem:[%s499 + $0xe8] sm:$0xff]
        %v1840 = vld [vmem:[%s499 + $0xf0] sm:$0xff]
        %v1841 = vld [vmem:[%s499 + $0xf8] sm:$0xff]
        %v1874 = vunpack.c.l.b16 %v1810
        %v1875 = vunpack.c.h.b16 %v1810
        %v1876 = vunpack.c.l.b16 %v1811
        %v1877 = vunpack.c.h.b16 %v1811
        %v1878 = vunpack.c.l.b16 %v1812
        %v1879 = vunpack.c.h.b16 %v1812
        %v1880 = vunpack.c.l.b16 %v1813
        %v1881 = vunpack.c.h.b16 %v1813
        %v1882 = vunpack.c.l.b16 %v1814
        %v1883 = vunpack.c.h.b16 %v1814
        %v1884 = vunpack.c.l.b16 %v1815
        %v1885 = vunpack.c.h.b16 %v1815
        %v1886 = vunpack.c.l.b16 %v1816
        %v1887 = vunpack.c.h.b16 %v1816
        %v1888 = vunpack.c.l.b16 %v1817
        %v1889 = vunpack.c.h.b16 %v1817
        %v1890 = vunpack.c.l.b16 %v1818
        %v1891 = vunpack.c.h.b16 %v1818
        %v1892 = vunpack.c.l.b16 %v1819
        %v1893 = vunpack.c.h.b16 %v1819
        %v1894 = vunpack.c.l.b16 %v1820
        %v1895 = vunpack.c.h.b16 %v1820
        %v1896 = vunpack.c.l.b16 %v1821
        %v1897 = vunpack.c.h.b16 %v1821
        %v1898 = vunpack.c.l.b16 %v1822
        %v1899 = vunpack.c.h.b16 %v1822
        %v1900 = vunpack.c.l.b16 %v1823
        %v1901 = vunpack.c.h.b16 %v1823
        %v1902 = vunpack.c.l.b16 %v1824
        %v1903 = vunpack.c.h.b16 %v1824
        %v1904 = vunpack.c.l.b16 %v1825
        %v1905 = vunpack.c.h.b16 %v1825
        %v1906 = vunpack.c.l.b16 %v1826
        %v1907 = vunpack.c.h.b16 %v1826
        %v1908 = vunpack.c.l.b16 %v1827
        %v1909 = vunpack.c.h.b16 %v1827
        %v1910 = vunpack.c.l.b16 %v1828
        %v1911 = vunpack.c.h.b16 %v1828
        %v1912 = vunpack.c.l.b16 %v1829
        %v1913 = vunpack.c.h.b16 %v1829
        %v1914 = vunpack.c.l.b16 %v1830
        %v1915 = vunpack.c.h.b16 %v1830
        %v1916 = vunpack.c.l.b16 %v1831
        %v1917 = vunpack.c.h.b16 %v1831
        %v1918 = vunpack.c.l.b16 %v1832
        %v1919 = vunpack.c.h.b16 %v1832
        %v1920 = vunpack.c.l.b16 %v1833
        %v1921 = vunpack.c.h.b16 %v1833
        %v1922 = vunpack.c.l.b16 %v1834
        %v1923 = vunpack.c.h.b16 %v1834
        %v1924 = vunpack.c.l.b16 %v1835
        %v1925 = vunpack.c.h.b16 %v1835
        %v1926 = vunpack.c.l.b16 %v1836
        %v1927 = vunpack.c.h.b16 %v1836
        %v1928 = vunpack.c.l.b16 %v1837
        %v1929 = vunpack.c.h.b16 %v1837
        %v1930 = vunpack.c.l.b16 %v1838
        %v1931 = vunpack.c.h.b16 %v1838
        %v1932 = vunpack.c.l.b16 %v1839
        %v1933 = vunpack.c.h.b16 %v1839
        %v1934 = vunpack.c.l.b16 %v1840
        %v1935 = vunpack.c.h.b16 %v1840
        %v1936 = vunpack.c.l.b16 %v1841
        %v1937 = vunpack.c.h.b16 %v1841
        %v1938 = vpack.c.b16 %v1878, %v1874
        %v1939 = vpack.c.b16 %v1879, %v1875
        %v1940 = vpack.c.b16 %v1880, %v1876
        %v1941 = vpack.c.b16 %v1881, %v1877
        %v1942 = vpack.c.b16 %v1886, %v1882
        %v1943 = vpack.c.b16 %v1887, %v1883
        %v1944 = vpack.c.b16 %v1888, %v1884
        %v1945 = vpack.c.b16 %v1889, %v1885
        %v1946 = vpack.c.b16 %v1894, %v1890
        %v1947 = vpack.c.b16 %v1895, %v1891
        %v1948 = vpack.c.b16 %v1896, %v1892
        %v1949 = vpack.c.b16 %v1897, %v1893
        %v1950 = vpack.c.b16 %v1902, %v1898
        %v1951 = vpack.c.b16 %v1903, %v1899
        %v1952 = vpack.c.b16 %v1904, %v1900
        %v1953 = vpack.c.b16 %v1905, %v1901
        %v1954 = vpack.c.b16 %v1910, %v1906
        %v1955 = vpack.c.b16 %v1911, %v1907
        %v1956 = vpack.c.b16 %v1912, %v1908
        %v1957 = vpack.c.b16 %v1913, %v1909
        %v1958 = vpack.c.b16 %v1918, %v1914
        %v1959 = vpack.c.b16 %v1919, %v1915
        %v1960 = vpack.c.b16 %v1920, %v1916
        %v1961 = vpack.c.b16 %v1921, %v1917
        %v1962 = vpack.c.b16 %v1926, %v1922
        %v1963 = vpack.c.b16 %v1927, %v1923
        %v1964 = vpack.c.b16 %v1928, %v1924
        %v1965 = vpack.c.b16 %v1929, %v1925
        %v1966 = vpack.c.b16 %v1934, %v1930
        %v1967 = vpack.c.b16 %v1935, %v1931
        %v1968 = vpack.c.b16 %v1936, %v1932
        %v1969 = vpack.c.b16 %v1937, %v1933
        %2002 = vmatpush.bf16.msra.mxu0 %v1966
        %2003 = vmatpush.bf16.msra.mxu0 %v1962
        %2004 = vmatpush.bf16.msra.mxu0 %v1958
        %2005 = vmatpush.bf16.msra.mxu0 %v1954
        %2006 = vmatpush.bf16.msra.mxu0 %v1950
        %2007 = vmatpush.bf16.msra.mxu0 %v1946
        %2008 = vmatpush.bf16.msra.mxu0 %v1942
        %2009 = vmatpush.bf16.msra.mxu0 %v1938
        %2010 = vmatmul.bf16.gmra.mxu0 %v1809
        %v2011 = vpop.f32.mrf.mxu0
        %v2012 = vadd.f32 0.0, %v2011
        %v2013 = vpop.f32.mrf.mxu0
        %v2014 = vadd.f32 0.0, %v2013
        %2015 = vdwg.mxu0
        %2016 = vmatpush.bf16.msra.mxu0 %v1967
        %2017 = vmatpush.bf16.msra.mxu0 %v1963
        %2018 = vmatpush.bf16.msra.mxu0 %v1959
        %2019 = vmatpush.bf16.msra.mxu0 %v1955
        %2020 = vmatpush.bf16.msra.mxu0 %v1951
        %2021 = vmatpush.bf16.msra.mxu0 %v1947
        %2022 = vmatpush.bf16.msra.mxu0 %v1943
        %2023 = vmatpush.bf16.msra.mxu0 %v1939
        %2024 = vmatmul.bf16.gmra.mxu0 %v1809
        %v2025 = vpop.f32.mrf.mxu0
        %v2026 = vadd.f32 0.0, %v2025
        %v2027 = vpop.f32.mrf.mxu0
        %v2028 = vadd.f32 0.0, %v2027
        %2029 = vdwg.mxu0
        %2030 = vmatpush.bf16.msra.mxu0 %v1968
        %2031 = vmatpush.bf16.msra.mxu0 %v1964
        %2032 = vmatpush.bf16.msra.mxu0 %v1960
        %2033 = vmatpush.bf16.msra.mxu0 %v1956
        %2034 = vmatpush.bf16.msra.mxu0 %v1952
        %2035 = vmatpush.bf16.msra.mxu0 %v1948
        %2036 = vmatpush.bf16.msra.mxu0 %v1944
        %2037 = vmatpush.bf16.msra.mxu0 %v1940
        %2038 = vmatmul.bf16.gmra.mxu0 %v1809
        %v2039 = vpop.f32.mrf.mxu0
        %v2040 = vadd.f32 0.0, %v2039
        %v2041 = vpop.f32.mrf.mxu0
        %v2042 = vadd.f32 0.0, %v2041
        %2043 = vdwg.mxu0
        %2044 = vmatpush.bf16.msra.mxu0 %v1969
        %2045 = vmatpush.bf16.msra.mxu0 %v1965
        %2046 = vmatpush.bf16.msra.mxu0 %v1961
        %2047 = vmatpush.bf16.msra.mxu0 %v1957
        %2048 = vmatpush.bf16.msra.mxu0 %v1953
        %2049 = vmatpush.bf16.msra.mxu0 %v1949
        %2050 = vmatpush.bf16.msra.mxu0 %v1945
        %2051 = vmatpush.bf16.msra.mxu0 %v1941
        %2052 = vmatmul.bf16.gmra.mxu0 %v1809
        %v2053 = vpop.f32.mrf.mxu0
        %v2054 = vadd.f32 0.0, %v2053
        %v2055 = vpop.f32.mrf.mxu0
        %v2056 = vadd.f32 0.0, %v2055
        %2057 = vdwg.mxu0
        %v2058 = vxor.u32 %v2012, 2147483648
        %v2059 = vxor.u32 %v2026, 2147483648
        %v2060 = vxor.u32 %v2014, 2147483648
        %v2061 = vxor.u32 %v2028, 2147483648
        %v2062 = vmul.f32 %v2058, 1.442695
        %v2063 = vpow.pop %v2062
        %v2064 = vmul.f32 %v2059, 1.442695
        %v2065 = vpow.pop %v2064
        %v2066 = vmul.f32 %v2060, 1.442695
        %v2067 = vpow.pop %v2066
        %v2068 = vmul.f32 %v2061, 1.442695
        %v2069 = vpow.pop %v2068
        %v2070 = vadd.f32 %v2063, 1.0
        %v2071 = vadd.f32 %v2065, 1.0
        %v2072 = vadd.f32 %v2067, 1.0
        %v2073 = vadd.f32 %v2069, 1.0
        %v2074 = vrcp.pop %v2070
        %v2075 = vmul.f32 %v2070, %v2074
        %v2076 = vsub.f32 1.0, %v2075
        %v2077 = vmul.f32 %v2074, %v2076
        %v2078 = vadd.f32 %v2074, %v2077
        %vm2079 = vweird.f32 %v2070
        %vm2080 = vweird.f32 %v2074
        %vm2081 = vmor %vm2079, %vm2080
        %v2082 = vsel %vm2081, %v2074, %v2078
        %v2083 = vand.u32 2147483647, %v2070
        %vm2084 = vcmp.eq.f32.partialorder %v2083, 8.507059e+37
        %v2085 = vand.u32 %v2070, 2147483648
        %v2086 = vor.u32 1.1754944e-38, %v2085
        %v2087 = vsel %vm2084, %v2086, %v2082
        %v2088 = vmul.f32 1.0, %v2087
        %v2089 = vrcp.pop %v2071
        %v2090 = vmul.f32 %v2071, %v2089
        %v2091 = vsub.f32 1.0, %v2090
        %v2092 = vmul.f32 %v2089, %v2091
        %v2093 = vadd.f32 %v2089, %v2092
        %vm2094 = vweird.f32 %v2071
        %vm2095 = vweird.f32 %v2089
        %vm2096 = vmor %vm2094, %vm2095
        %v2097 = vsel %vm2096, %v2089, %v2093
        %v2098 = vand.u32 2147483647, %v2071
        %vm2099 = vcmp.eq.f32.partialorder %v2098, 8.507059e+37
        %v2100 = vand.u32 %v2071, 2147483648
        %v2101 = vor.u32 1.1754944e-38, %v2100
        %v2102 = vsel %vm2099, %v2101, %v2097
        %v2103 = vmul.f32 1.0, %v2102
        %v2104 = vrcp.pop %v2072
        %v2105 = vmul.f32 %v2072, %v2104
        %v2106 = vsub.f32 1.0, %v2105
        %v2107 = vmul.f32 %v2104, %v2106
        %v2108 = vadd.f32 %v2104, %v2107
        %vm2109 = vweird.f32 %v2072
        %vm2110 = vweird.f32 %v2104
        %vm2111 = vmor %vm2109, %vm2110
        %v2112 = vsel %vm2111, %v2104, %v2108
        %v2113 = vand.u32 2147483647, %v2072
        %vm2114 = vcmp.eq.f32.partialorder %v2113, 8.507059e+37
        %v2115 = vand.u32 %v2072, 2147483648
        %v2116 = vor.u32 1.1754944e-38, %v2115
        %v2117 = vsel %vm2114, %v2116, %v2112
        %v2118 = vmul.f32 1.0, %v2117
        %v2119 = vrcp.pop %v2073
        %v2120 = vmul.f32 %v2073, %v2119
        %v2121 = vsub.f32 1.0, %v2120
        %v2122 = vmul.f32 %v2119, %v2121
        %v2123 = vadd.f32 %v2119, %v2122
        %vm2124 = vweird.f32 %v2073
        %vm2125 = vweird.f32 %v2119
        %vm2126 = vmor %vm2124, %vm2125
        %v2127 = vsel %vm2126, %v2119, %v2123
        %v2128 = vand.u32 2147483647, %v2073
        %vm2129 = vcmp.eq.f32.partialorder %v2128, 8.507059e+37
        %v2130 = vand.u32 %v2073, 2147483648
        %v2131 = vor.u32 1.1754944e-38, %v2130
        %v2132 = vsel %vm2129, %v2131, %v2127
        %v2133 = vmul.f32 1.0, %v2132
        %v2134 = vmul.f32 %v2012, %v2088
        %v2135 = vmul.f32 %v2026, %v2103
        %v2136 = vmul.f32 %v2014, %v2118
        %v2137 = vmul.f32 %v2028, %v2133
        %v2138 = vmul.f32 %v2134, %v2040
        %v2139 = vmul.f32 %v2135, %v2054
        %v2140 = vmul.f32 %v2136, %v2042
        %v2141 = vmul.f32 %v2137, %v2056
        %v2142 = vpack.c.bf16 %v2140, %v2138
        %v2143 = vpack.c.bf16 %v2141, %v2139
        %v2144 = vld [vmem:[%s567] sm:$0xf]
        %v2145 = vld [vmem:[%s567 + $0x4] sm:$0xf]
        %v2146 = vld [vmem:[%s567 + $0x8] sm:$0xf]
        %v2147 = vld [vmem:[%s567 + $0xc] sm:$0xf]
        %v2148 = vld [vmem:[%s567 + $0x10] sm:$0xf]
        %v2149 = vld [vmem:[%s567 + $0x14] sm:$0xf]
        %v2150 = vld [vmem:[%s567 + $0x18] sm:$0xf]
        %v2151 = vld [vmem:[%s567 + $0x1c] sm:$0xf]
        %v2152 = vld [vmem:[%s567 + $0x20] sm:$0xf]
        %v2153 = vld [vmem:[%s567 + $0x24] sm:$0xf]
        %v2154 = vld [vmem:[%s567 + $0x28] sm:$0xf]
        %v2155 = vld [vmem:[%s567 + $0x2c] sm:$0xf]
        %v2156 = vld [vmem:[%s567 + $0x30] sm:$0xf]
        %v2157 = vld [vmem:[%s567 + $0x34] sm:$0xf]
        %v2158 = vld [vmem:[%s567 + $0x38] sm:$0xf]
        %v2159 = vld [vmem:[%s567 + $0x3c] sm:$0xf]
        %v2160 = vld [vmem:[%s567 + $0x40] sm:$0xf]
        %v2161 = vld [vmem:[%s567 + $0x44] sm:$0xf]
        %v2162 = vld [vmem:[%s567 + $0x48] sm:$0xf]
        %v2163 = vld [vmem:[%s567 + $0x4c] sm:$0xf]
        %v2164 = vld [vmem:[%s567 + $0x50] sm:$0xf]
        %v2165 = vld [vmem:[%s567 + $0x54] sm:$0xf]
        %v2166 = vld [vmem:[%s567 + $0x58] sm:$0xf]
        %v2167 = vld [vmem:[%s567 + $0x5c] sm:$0xf]
        %v2168 = vld [vmem:[%s567 + $0x60] sm:$0xf]
        %v2169 = vld [vmem:[%s567 + $0x64] sm:$0xf]
        %v2170 = vld [vmem:[%s567 + $0x68] sm:$0xf]
        %v2171 = vld [vmem:[%s567 + $0x6c] sm:$0xf]
        %v2172 = vld [vmem:[%s567 + $0x70] sm:$0xf]
        %v2173 = vld [vmem:[%s567 + $0x74] sm:$0xf]
        %v2174 = vld [vmem:[%s567 + $0x78] sm:$0xf]
        %v2175 = vld [vmem:[%s567 + $0x7c] sm:$0xf]
        %v2208 = vunpack.c.l.b16 %v2144
        %v2209 = vunpack.c.l.b16 %v2145
        %v2210 = vunpack.c.l.b16 %v2146
        %v2211 = vunpack.c.l.b16 %v2147
        %v2212 = vunpack.c.l.b16 %v2148
        %v2213 = vunpack.c.l.b16 %v2149
        %v2214 = vunpack.c.l.b16 %v2150
        %v2215 = vunpack.c.l.b16 %v2151
        %v2216 = vunpack.c.l.b16 %v2152
        %v2217 = vunpack.c.l.b16 %v2153
        %v2218 = vunpack.c.l.b16 %v2154
        %v2219 = vunpack.c.l.b16 %v2155
        %v2220 = vunpack.c.l.b16 %v2156
        %v2221 = vunpack.c.l.b16 %v2157
        %v2222 = vunpack.c.l.b16 %v2158
        %v2223 = vunpack.c.l.b16 %v2159
        %v2224 = vunpack.c.l.b16 %v2160
        %v2225 = vunpack.c.l.b16 %v2161
        %v2226 = vunpack.c.l.b16 %v2162
        %v2227 = vunpack.c.l.b16 %v2163
        %v2228 = vunpack.c.l.b16 %v2164
        %v2229 = vunpack.c.l.b16 %v2165
        %v2230 = vunpack.c.l.b16 %v2166
        %v2231 = vunpack.c.l.b16 %v2167
        %v2232 = vunpack.c.l.b16 %v2168
        %v2233 = vunpack.c.l.b16 %v2169
        %v2234 = vunpack.c.l.b16 %v2170
        %v2235 = vunpack.c.l.b16 %v2171
        %v2236 = vunpack.c.l.b16 %v2172
        %v2237 = vunpack.c.l.b16 %v2173
        %v2238 = vunpack.c.l.b16 %v2174
        %v2239 = vunpack.c.l.b16 %v2175
        %v2240 = vpack.c.b16 %v2209, %v2208
        %v2241 = vpack.c.b16 %v2211, %v2210
        %v2242 = vpack.c.b16 %v2213, %v2212
        %v2243 = vpack.c.b16 %v2215, %v2214
        %v2244 = vpack.c.b16 %v2217, %v2216
        %v2245 = vpack.c.b16 %v2219, %v2218
        %v2246 = vpack.c.b16 %v2221, %v2220
        %v2247 = vpack.c.b16 %v2223, %v2222
        %v2248 = vpack.c.b16 %v2225, %v2224
        %v2249 = vpack.c.b16 %v2227, %v2226
        %v2250 = vpack.c.b16 %v2229, %v2228
        %v2251 = vpack.c.b16 %v2231, %v2230
        %v2252 = vpack.c.b16 %v2233, %v2232
        %v2253 = vpack.c.b16 %v2235, %v2234
        %v2254 = vpack.c.b16 %v2237, %v2236
        %v2255 = vpack.c.b16 %v2239, %v2238
        %2272 = vmatpush.bf16.msra.mxu0 %v2247
        %2273 = vmatpush.bf16.msra.mxu0 %v2246
        %2274 = vmatpush.bf16.msra.mxu0 %v2245
        %2275 = vmatpush.bf16.msra.mxu0 %v2244
        %2276 = vmatpush.bf16.msra.mxu0 %v2243
        %2277 = vmatpush.bf16.msra.mxu0 %v2242
        %2278 = vmatpush.bf16.msra.mxu0 %v2241
        %2279 = vmatpush.bf16.msra.mxu0 %v2240
        %2280 = vmatmul.bf16.gmra.mxu0 %v2142
        %v2281 = vpop.f32.mrf.mxu0
        %v2282 = vadd.f32 0.0, %v2281
        %v2283 = vpop.f32.mrf.mxu0
        %v2284 = vadd.f32 0.0, %v2283
        %2285 = vdwg.mxu0
        %2286 = vmatpush.bf16.msra.mxu0 %v2255
        %2287 = vmatpush.bf16.msra.mxu0 %v2254
        %2288 = vmatpush.bf16.msra.mxu0 %v2253
        %2289 = vmatpush.bf16.msra.mxu0 %v2252
        %2290 = vmatpush.bf16.msra.mxu0 %v2251
        %2291 = vmatpush.bf16.msra.mxu0 %v2250
        %2292 = vmatpush.bf16.msra.mxu0 %v2249
        %2293 = vmatpush.bf16.msra.mxu0 %v2248
        %2294 = vmatmul.bf16.gmra.mxu0 %v2143
        %v2295 = vpop.f32.mrf.mxu0
        %v2296 = vadd.f32 %v2282, %v2295
        %v2297 = vpop.f32.mrf.mxu0
        %v2298 = vadd.f32 %v2284, %v2297
        %2299 = vdwg.mxu0
        %v2300 = vadd.f32 %v1769, %v2296
        %v2301 = vadd.f32 %v1770, %v2298
        %2302 = vst [vmem:[#allocation2] sm:$0xff] %v2300
        %2303 = vst [vmem:[#allocation2 + $0x8] sm:$0xff] %v2301
        %p2304 = scmp.eq.s32.totalorder %s31, 1
        // Predicated region
        $region89: #{llama_forward.1} parent=67 // pred_check
          %p2305 = pneg %p2304
        $region90: #{llama_forward.1} parent=67 // pred_check_branch
          %2307 = sbr.rel (%p2305) target = $region92
        $region91: #{llama_forward.1} parent=67 // pred_region
          %v2308 = vld [vmem:[%s4] sm:$0x1]
          %v2309 = vmul.f32 %v2300, %v2300
          %v2310 = vmul.f32 %v2301, %v2301
          %2311 = vadd.xlane.f32.xlu0 %v2309
          %v2312 = vpop.xlane.xlu0 %2311
          %2313 = vadd.xlane.f32.xlu0 %v2310
          %v2314 = vpop.xlane.xlu0 %2313
          %v2315 = vmul.f32 %v2312, %v602
          %v2316 = vmul.f32 %v2314, %v602
          %v2317 = vadd.f32 %v2315, 1e-06
          %v2318 = vadd.f32 %v2316, 1e-06
          %v2319 = vrsqrt.pop %v2317
          %v2320 = vmul.f32 %v2319, %v2317
          %v2321 = vmul.f32 %v2320, %v2319
          %v2322 = vmul.f32 0.5, %v2321
          %v2323 = vsub.f32 1.5, %v2322
          %v2324 = vmul.f32 %v2319, %v2323
          %vm2325 = vweird.f32 %v2317
          %vm2326 = vweird.f32 %v2319
          %vm2327 = vmor %vm2325, %vm2326
          %v2328 = vsel %vm2327, %v2319, %v2324
          %v2329 = vrsqrt.pop %v2318
          %v2330 = vmul.f32 %v2329, %v2318
          %v2331 = vmul.f32 %v2330, %v2329
          %v2332 = vmul.f32 0.5, %v2331
          %v2333 = vsub.f32 1.5, %v2332
          %v2334 = vmul.f32 %v2329, %v2333
          %vm2335 = vweird.f32 %v2318
          %vm2336 = vweird.f32 %v2329
          %vm2337 = vmor %vm2335, %vm2336
          %v2338 = vsel %vm2337, %v2329, %v2334
          %v2339 = vmul.f32 %v2300, %v2328
          %v2340 = vmul.f32 %v2301, %v2338
          %v2342 = vperm.slane %v2308, 0
          %v2344 = vmul.f32 %v2339, %v2342
          %v2345 = vmul.f32 %v2340, %v2342
          %v2346 = vpack.c.bf16 %v2345, %v2344
          %v2347 = vld [vmem:[#allocation3] sm:$0xff]
          %v2348 = vld [vmem:[#allocation3 + $0x8] sm:$0xff]
          %v2349 = vld [vmem:[#allocation3 + $0x10] sm:$0xff]
          %v2350 = vld [vmem:[#allocation3 + $0x18] sm:$0xff]
          %v2351 = vld [vmem:[#allocation3 + $0x20] sm:$0xff]
          %v2352 = vld [vmem:[#allocation3 + $0x28] sm:$0xff]
          %v2353 = vld [vmem:[#allocation3 + $0x30] sm:$0xff]
          %v2354 = vld [vmem:[#allocation3 + $0x38] sm:$0xff]
          %v2355 = vld [vmem:[#allocation3 + $0x40] sm:$0xff]
          %v2356 = vld [vmem:[#allocation3 + $0x48] sm:$0xff]
          %v2357 = vld [vmem:[#allocation3 + $0x50] sm:$0xff]
          %v2358 = vld [vmem:[#allocation3 + $0x58] sm:$0xff]
          %v2359 = vld [vmem:[#allocation3 + $0x60] sm:$0xff]
          %v2360 = vld [vmem:[#allocation3 + $0x68] sm:$0xff]
          %v2361 = vld [vmem:[#allocation3 + $0x70] sm:$0xff]
          %v2362 = vld [vmem:[#allocation3 + $0x78] sm:$0xff]
          %v2379 = vunpack.c.l.b16 %v2347
          %v2380 = vunpack.c.h.b16 %v2347
          %v2381 = vunpack.c.l.b16 %v2348
          %v2382 = vunpack.c.h.b16 %v2348
          %v2383 = vunpack.c.l.b16 %v2349
          %v2384 = vunpack.c.h.b16 %v2349
          %v2385 = vunpack.c.l.b16 %v2350
          %v2386 = vunpack.c.h.b16 %v2350
          %v2387 = vunpack.c.l.b16 %v2351
          %v2388 = vunpack.c.h.b16 %v2351
          %v2389 = vunpack.c.l.b16 %v2352
          %v2390 = vunpack.c.h.b16 %v2352
          %v2391 = vunpack.c.l.b16 %v2353
          %v2392 = vunpack.c.h.b16 %v2353
          %v2393 = vunpack.c.l.b16 %v2354
          %v2394 = vunpack.c.h.b16 %v2354
          %v2395 = vunpack.c.l.b16 %v2355
          %v2396 = vunpack.c.h.b16 %v2355
          %v2397 = vunpack.c.l.b16 %v2356
          %v2398 = vunpack.c.h.b16 %v2356
          %v2399 = vunpack.c.l.b16 %v2357
          %v2400 = vunpack.c.h.b16 %v2357
          %v2401 = vunpack.c.l.b16 %v2358
          %v2402 = vunpack.c.h.b16 %v2358
          %v2403 = vunpack.c.l.b16 %v2359
          %v2404 = vunpack.c.h.b16 %v2359
          %v2405 = vunpack.c.l.b16 %v2360
          %v2406 = vunpack.c.h.b16 %v2360
          %v2407 = vunpack.c.l.b16 %v2361
          %v2408 = vunpack.c.h.b16 %v2361
          %v2409 = vunpack.c.l.b16 %v2362
          %v2410 = vunpack.c.h.b16 %v2362
          %v2411 = vpack.c.b16 %v2381, %v2379
          %v2412 = vpack.c.b16 %v2382, %v2380
          %v2413 = vpack.c.b16 %v2385, %v2383
          %v2414 = vpack.c.b16 %v2386, %v2384
          %v2415 = vpack.c.b16 %v2389, %v2387
          %v2416 = vpack.c.b16 %v2390, %v2388
          %v2417 = vpack.c.b16 %v2393, %v2391
          %v2418 = vpack.c.b16 %v2394, %v2392
          %v2419 = vpack.c.b16 %v2397, %v2395
          %v2420 = vpack.c.b16 %v2398, %v2396
          %v2421 = vpack.c.b16 %v2401, %v2399
          %v2422 = vpack.c.b16 %v2402, %v2400
          %v2423 = vpack.c.b16 %v2405, %v2403
          %v2424 = vpack.c.b16 %v2406, %v2404
          %v2425 = vpack.c.b16 %v2409, %v2407
          %v2426 = vpack.c.b16 %v2410, %v2408
          %2443 = vmatpush.bf16.msra.mxu0 %v2425
          %2444 = vmatpush.bf16.msra.mxu0 %v2423
          %2445 = vmatpush.bf16.msra.mxu0 %v2421
          %2446 = vmatpush.bf16.msra.mxu0 %v2419
          %2447 = vmatpush.bf16.msra.mxu0 %v2417
          %2448 = vmatpush.bf16.msra.mxu0 %v2415
          %2449 = vmatpush.bf16.msra.mxu0 %v2413
          %2450 = vmatpush.bf16.msra.mxu0 %v2411
          %2451 = vmatmul.bf16.gmra.mxu0 %v2346
          %v2452 = vpop.f32.mrf.mxu0
          %v2453 = vadd.f32 0.0, %v2452
          %v2454 = vpop.f32.mrf.mxu0
          %v2455 = vadd.f32 0.0, %v2454
          %2456 = vdwg.mxu0
          %2457 = vmatpush.bf16.msra.mxu0 %v2426
          %2458 = vmatpush.bf16.msra.mxu0 %v2424
          %2459 = vmatpush.bf16.msra.mxu0 %v2422
          %2460 = vmatpush.bf16.msra.mxu0 %v2420
          %2461 = vmatpush.bf16.msra.mxu0 %v2418
          %2462 = vmatpush.bf16.msra.mxu0 %v2416
          %2463 = vmatpush.bf16.msra.mxu0 %v2414
          %2464 = vmatpush.bf16.msra.mxu0 %v2412
          %2465 = vmatmul.bf16.gmra.mxu0 %v2346
          %v2466 = vpop.f32.mrf.mxu0
          %v2467 = vadd.f32 0.0, %v2466
          %v2468 = vpop.f32.mrf.mxu0
          %v2469 = vadd.f32 0.0, %v2468
          %2470 = vdwg.mxu0
          %2471 = vst [vmem:[#allocation11] sm:$0xff] %v2453
          %2472 = vst [vmem:[#allocation11 + $0x8] sm:$0xff] %v2467
          %2473 = vst [vmem:[#allocation11 + $0x10] sm:$0xff] %v2455
          %2474 = vst [vmem:[#allocation11 + $0x18] sm:$0xff] %v2469
        $region92: #{llama_forward.1} parent=67 // pred_fallthru
          _
        // Predicated region
        $region93: #{llama_forward.1} parent=67 // pred_check
          %p2475 = pneg %p326
        $region94: #{llama_forward.1} parent=67 // pred_check_branch
          %2477 = sbr.rel (%p2475) target = $region96
        $region95: #{llama_forward.1} parent=67 // pred_region
          %2479 = vsyncadd [#allocation5], 0
          %s2480 = sshll.u32 [#allocation11], 4
          %s2481 = int_to_ptr.vmem [resolvable:$true] %s2480
          %s2482 = sshll.u32 %s12, 4
          %s2483 = int_to_ptr.hbm [resolvable:$true] %s2482
          %2488 = dma.vmem_to_hbm [thread:$0]  %s2481, 512, %s2483, [#allocation5], 256, 256, 16
        $region96: #{llama_forward.1} parent=67 // pred_fallthru
          _
        // Predicated region
        $region97: #{llama_forward.1} parent=67 // pred_check
          %p2489 = pneg %p326
        $region98: #{llama_forward.1} parent=67 // pred_check_branch
          %2491 = sbr.rel (%p2489) target = $region100
        $region99: #{llama_forward.1} parent=67 // pred_region
          %2493 = dma.done [#allocation5], 512
        $region100: #{llama_forward.1} parent=67 // pred_fallthru
          _
      $region68: #{llama_forward.1} parent=5 // pred_fallthru
        _
      %p2494 = scmp.le.s32.totalorder 2, %s26
      // Predicated region
      $region101: #{llama_forward.1} parent=5 // pred_check
        %p2495 = pneg %p2494
      $region102: #{llama_forward.1} parent=5 // pred_check_branch
        %2497 = sbr.rel (%p2495) target = $region104
      $region103: #{llama_forward.1} parent=5 // pred_region
        %s2498 = ssub.s32 %s26, 2
      $region104: #{llama_forward.1} parent=5 // pred_fallthru
        _
    $region6: #{llama_forward.1} parent=1 // loop_footer
      %s30 = sadd.s32 1, %s26
    $region7: #{llama_forward.1} parent=1 // loop_footer_branch
      %25 = sbr.rel target = $region3
    $region8: #{llama_forward.1} parent=1 // loop_exit
      _
    %2499 = vsyncpa [#allocation4], 1
    %s2500 = scalar_lea.sflag [#allocation4], 1
    %2501 = vsyncpa %s2500, 1
    %2502 = vsyncpa [#allocation7], 1
    %s2503 = scalar_lea.sflag [#allocation7], 1
    %2504 = vsyncpa %s2503, 1
    %2505 = vsyncpa [#allocation10], 1
    %s2506 = scalar_lea.sflag [#allocation10], 1
    %2507 = vsyncpa %s2506, 1
    %2508 = vsyncpa [#allocation5], 1
    %s2509 = scalar_lea.sflag [#allocation5], 1
    %2510 = vsyncpa %s2509, 1

</llo_original>
